<compile_context>
chip_gen: v6e
topology: v6e:2x2x1
jax: 0.10.0
libtpu: 0.0.40
codegen_flags: <defaults>
</compile_context>

<pallas_src>
import functools

import jax
import jax.numpy as jnp
from jax.experimental import pallas as pl
from jax.experimental.pallas import tpu as pltpu


def rnn_kernel(x_ref, wxh_ref, whh_ref, aux_ref, bout_ref, out_ref,
               h_scratch, *, tc):
    # x_ref:    [bb, tc, I]  current (batch-chunk, time-chunk) X block
    # wxh_ref:  [I, Hp]      whh_ref: [Hp, Hp]
    # aux_ref:  [2, Hp]      row 0 = b_h, row 1 = (W_ho @ W_fc)^T   (zero padded)
    # bout_ref: [1, 1]       SMEM scalar = b_o @ W_fc + b_fc
    # out_ref:  [bb, 1]      h_scratch: VMEM [bb, Hp] hidden-state carry
    t_idx = pl.program_id(1)

    @pl.when(t_idx == 0)
    def _():
        h_scratch[...] = jnp.zeros_like(h_scratch)

    # Hoist weight/bias loads out of the unrolled recurrence.
    wxh = wxh_ref[...]
    whh = whh_ref[...]
    bh = aux_ref[0:1, :]

    # h lives in vregs within the chunk; VMEM only at chunk boundaries.
    h = h_scratch[...]

    # TODO(synk): hold W_hh stationary in the MXU across the unrolled steps
    # (pltpu.matmul_push_rhs / matmul_acc_lhs / matmul_pop) if the bundle dump
    # shows Mosaic re-pushing the 128x128 RHS every iteration.
    for i in range(tc):  # static trip count -> fully unrolled, LLO-visible
        x_t = x_ref[:, i, :]                                          # [bb, I]
        # Per-step input projection: independent of h, so it runs ahead of /
        # under the serial matmul->tanh dependence chain.
        u_t = jnp.dot(x_t, wxh, preferred_element_type=jnp.float32) + bh
        h = jnp.tanh(u_t + jnp.dot(h, whh, preferred_element_type=jnp.float32))

    h_scratch[...] = h

    # Folded output head, only on the final time chunk: VPU multiply + lane
    # reduce plus an SMEM scalar bias (no degenerate N=1 MXU matmul).
    @pl.when(t_idx == pl.num_programs(1) - 1)
    def _():
        # TODO(synk): at production batch, emit a lane-dense [*, mult-of-128]
        # output slab instead of a last-dim-1 column (masked vst otherwise).
        y = jnp.sum(h * aux_ref[1:2, :], axis=-1, keepdims=True) + bout_ref[0, 0]
        out_ref[...] = y.astype(out_ref.dtype)


def _pick_time_chunk(T, max_chunk=32):
    # Chunk must divide T and satisfy the (8,128) block constraint:
    # either tc == T or tc a multiple of 8.
    if T <= max_chunk:
        return T
    for c in range(max_chunk, 7, -1):
        if c % 8 == 0 and T % c == 0:
            return c
    return T  # fallback: single chunk (no time pipelining)


def _pick_batch_chunk(B_pad):
    for c in (128, 64, 32, 16, 8):
        if B_pad % c == 0:
            return c
    return B_pad


def rnn_forward(x, params):
    """x: [B, T, I] float32. Returns [B, 1] float32."""
    B, T, I = x.shape
    H = params["W_hh"].shape[0]
    f32 = jnp.float32

    H_pad = max(128, pl.cdiv(H, 128) * 128)   # lane-dense hidden width
    B_pad = pl.cdiv(B, 8) * 8                 # sublane-aligned batch
    tc = _pick_time_chunk(T)
    bb = _pick_batch_chunk(B_pad)

    # Fold the two output projections (exact linear composition).
    w_out = params["W_ho"] @ params["W_fc"]                     # [H, 1]
    b_out = params["b_o"] @ params["W_fc"] + params["b_fc"]     # [1, 1]

    dH = H_pad - H
    wxh = jnp.pad(params["W_xh"].astype(f32), ((0, 0), (0, dH)))
    whh = jnp.pad(params["W_hh"].astype(f32), ((0, dH), (0, dH)))
    bh = jnp.pad(params["b_h"].astype(f32), ((0, 0), (0, dH)))
    wout_row = jnp.pad(w_out.T.astype(f32), ((0, 0), (0, dH)))  # [1, H_pad]
    aux = jnp.concatenate([bh, wout_row], axis=0)               # [2, H_pad]

    # X stays batch-major [B, T, I]: no wrapper transpose -> no extra HBM copy.
    xb = x.astype(f32)
    if B_pad != B:
        xb = jnp.pad(xb, ((0, B_pad - B), (0, 0), (0, 0)))

    grid = (B_pad // bb, T // tc)  # (parallel batch chunks, serial time chunks)

    out = pl.pallas_call(
        functools.partial(rnn_kernel, tc=tc),
        out_shape=jax.ShapeDtypeStruct((B_pad, 1), jnp.float32),
        grid_spec=pltpu.PrefetchScalarGridSpec(
            num_scalar_prefetch=0,
            grid=grid,
            in_specs=[
                pl.BlockSpec((bb, tc, I), lambda b, t: (b, t, 0)),   # X chunk
                pl.BlockSpec((I, H_pad), lambda b, t: (0, 0)),       # W_xh
                pl.BlockSpec((H_pad, H_pad), lambda b, t: (0, 0)),   # W_hh
                pl.BlockSpec((2, H_pad), lambda b, t: (0, 0)),       # b_h | w_out
                pl.BlockSpec(memory_space=pltpu.MemorySpace.SMEM),   # b_out scalar
            ],
            out_specs=pl.BlockSpec((bb, 1), lambda b, t: (b, 0)),
            scratch_shapes=[pltpu.VMEM((bb, H_pad), jnp.float32)],   # h carry
        ),
        compiler_params=pltpu.CompilerParams(
            dimension_semantics=("parallel", "arbitrary"),
            # Chunk footprint (2x X chunk + weights + h) is << v7x's 64 MiB;
            # set the scoped limit explicitly so the same tiling ports across
            # v5e/v6e/v7x without silent OOM.
            vmem_limit_bytes=32 * 1024 * 1024,
        ),
    )(xb, wxh, whh, aux, b_out.astype(f32))
    return out[:B]


def init_params(key, input_size, hidden_size=30, rnn_out_size=10):
    ks = jax.random.split(key, 7)
    scale = 0.1
    return {
        "W_xh": scale * jax.random.normal(ks[0], (input_size, hidden_size), jnp.float32),
        "W_hh": scale * jax.random.normal(ks[1], (hidden_size, hidden_size), jnp.float32),
        "b_h":  scale * jax.random.normal(ks[2], (1, hidden_size), jnp.float32),
        "W_ho": scale * jax.random.normal(ks[3], (hidden_size, rnn_out_size), jnp.float32),
        "b_o":  scale * jax.random.normal(ks[4], (1, rnn_out_size), jnp.float32),
        # fc: nn.Linear(10, 1) — stored as [10, 1] (already transposed)
        "W_fc": scale * jax.random.normal(ks[5], (rnn_out_size, 1), jnp.float32),
        "b_fc": scale * jax.random.normal(ks[6], (1, 1), jnp.float32),
    }


if __name__ == "__main__":
    key = jax.random.PRNGKey(0)
    B, T, I = 8, 8, 16  # batch, seq length, input_size
    k_x, k_p = jax.random.split(key)
    x = jax.random.normal(k_x, (B, T, I), jnp.float32)
    params = init_params(k_p, input_size=I)

    y = rnn_forward(x, params)
    jax.block_until_ready(y)
    assert y.shape == (B, 1), y.shape

    # pure-JAX reference of the original (unfolded, unpadded) math
    def ref(x, p):
        h = jnp.zeros((x.shape[0], p["W_hh"].shape[0]), jnp.float32)
        for t in range(x.shape[1]):
            h = jnp.tanh(x[:, t, :] @ p["W_xh"] + h @ p["W_hh"] + p["b_h"])
        r = h @ p["W_ho"] + p["b_o"]
        return r @ p["W_fc"] + p["b_fc"]

    y_ref = ref(x, params)
    assert jnp.allclose(y, y_ref, atol=1e-5, rtol=1e-5)
    print("KERNEL_OK")
</pallas_src>

<mosaic_0001>
module attributes {stable_mosaic.version = 11 : i64} {
  func.func @rnn_kernel(%arg0: i32, %arg1: i32, %arg2: memref<8x8x16xf32, #tpu.memory_space<vmem>>, %arg3: memref<16x128xf32, #tpu.memory_space<vmem>>, %arg4: memref<128x128xf32, #tpu.memory_space<vmem>>, %arg5: memref<2x128xf32, #tpu.memory_space<vmem>>, %arg6: memref<1x1xf32, #tpu.memory_space<smem>>, %arg7: memref<8x1xf32, #tpu.memory_space<vmem>>, %arg8: memref<8x128xf32, #tpu.memory_space<vmem>>) attributes {dimension_semantics = [#tpu.dimension_semantics<parallel>, #tpu.dimension_semantics<arbitrary>], iteration_bounds = array<i64: 1, 1>, scalar_prefetch = 0 : i64, scratch_operands = 1 : i64, tpu.core_type = #tpu.core_type<tc>, window_params = [{transform_indices = @transform_0, window_bounds = array<i64: 8, 8, 16>}, {pipeline_mode = #tpu.pipeline_mode<synchronous>, transform_indices = @transform_1, window_bounds = array<i64: 16, 128>}, {pipeline_mode = #tpu.pipeline_mode<synchronous>, transform_indices = @transform_2, window_bounds = array<i64: 128, 128>}, {pipeline_mode = #tpu.pipeline_mode<synchronous>, transform_indices = @transform_3, window_bounds = array<i64: 2, 128>}, {transform_indices = @transform_4, window_bounds = array<i64: 1, 1>}, {transform_indices = @transform_5, window_bounds = array<i64: 8, 1>}]} {
    %c0_i32 = arith.constant 0 : i32
    %0 = arith.cmpi eq, %arg1, %c0_i32 : i32
    %1 = arith.extui %0 : i1 to i32
    %c0_i32_0 = arith.constant 0 : i32
    %2 = arith.cmpi ne, %1, %c0_i32_0 : i32
    scf.if %2 {
      %cst_44 = arith.constant 0.000000e+00 : f32
      %75 = vector.broadcast %cst_44 : f32 to vector<8x128xf32>
      %c0_45 = arith.constant 0 : index
      %c0_46 = arith.constant 0 : index
      %76 = vector.load %arg8[%c0_45, %c0_46] : memref<8x128xf32, #tpu.memory_space<vmem>>, vector<8x128xf32>
      tpu.vector_store %arg8[%c0_45, %c0_46], %75 {strides = array<i32>} : memref<8x128xf32, #tpu.memory_space<vmem>>, vector<8x128xf32>,
    } else {
    }
    %c0 = arith.constant 0 : index
    %c0_1 = arith.constant 0 : index
    %3 = vector.load %arg3[%c0, %c0_1] : memref<16x128xf32, #tpu.memory_space<vmem>>, vector<16x128xf32>
    %c0_2 = arith.constant 0 : index
    %c0_3 = arith.constant 0 : index
    %4 = vector.load %arg4[%c0_2, %c0_3] : memref<128x128xf32, #tpu.memory_space<vmem>>, vector<128x128xf32>
    %c0_4 = arith.constant 0 : index
    %c0_5 = arith.constant 0 : index
    %5 = vector.load %arg5[%c0_4, %c0_5] : memref<2x128xf32, #tpu.memory_space<vmem>>, vector<1x128xf32>
    %c0_6 = arith.constant 0 : index
    %c0_7 = arith.constant 0 : index
    %6 = vector.load %arg8[%c0_6, %c0_7] : memref<8x128xf32, #tpu.memory_space<vmem>>, vector<8x128xf32>
    %c0_8 = arith.constant 0 : index
    %c0_9 = arith.constant 0 : index
    %c0_10 = arith.constant 0 : index
    %7 = vector.load %arg2[%c0_8, %c0_9, %c0_10] : memref<8x8x16xf32, #tpu.memory_space<vmem>>, vector<8x1x16xf32>
    %8 = vector.shape_cast %7 : vector<8x1x16xf32> to vector<8x16xf32>
    %cst = arith.constant dense<0.000000e+00> : vector<8x128xf32>
    %9 = tpu.matmul %8, %3, %cst {dimension_numbers = #tpu.dot_dimension_numbers<[1], [0], [0], [1], [0, 0, 1, 1], [], []>} : vector<8x16xf32>, vector<16x128xf32>, vector<8x128xf32> -> vector<8x128xf32>
    %10 = vector.broadcast %5 : vector<1x128xf32> to vector<8x128xf32>
    %11 = arith.addf %9, %10 : vector<8x128xf32>
    %cst_11 = arith.constant dense<0.000000e+00> : vector<8x128xf32>
    %12 = tpu.matmul %6, %4, %cst_11 {dimension_numbers = #tpu.dot_dimension_numbers<[1], [0], [0], [1], [0, 0, 1, 1], [], []>} : vector<8x128xf32>, vector<128x128xf32>, vector<8x128xf32> -> vector<8x128xf32>
    %13 = arith.addf %11, %12 : vector<8x128xf32>
    %14 = math.tanh %13 : vector<8x128xf32>
    %c0_12 = arith.constant 0 : index
    %c1 = arith.constant 1 : index
    %c0_13 = arith.constant 0 : index
    %15 = vector.load %arg2[%c0_12, %c1, %c0_13] : memref<8x8x16xf32, #tpu.memory_space<vmem>>, vector<8x1x16xf32>
    %16 = vector.shape_cast %15 : vector<8x1x16xf32> to vector<8x16xf32>
    %cst_14 = arith.constant dense<0.000000e+00> : vector<8x128xf32>
    %17 = tpu.matmul %16, %3, %cst_14 {dimension_numbers = #tpu.dot_dimension_numbers<[1], [0], [0], [1], [0, 0, 1, 1], [], []>} : vector<8x16xf32>, vector<16x128xf32>, vector<8x128xf32> -> vector<8x128xf32>
    %18 = vector.broadcast %5 : vector<1x128xf32> to vector<8x128xf32>
    %19 = arith.addf %17, %18 : vector<8x128xf32>
    %cst_15 = arith.constant dense<0.000000e+00> : vector<8x128xf32>
    %20 = tpu.matmul %14, %4, %cst_15 {dimension_numbers = #tpu.dot_dimension_numbers<[1], [0], [0], [1], [0, 0, 1, 1], [], []>} : vector<8x128xf32>, vector<128x128xf32>, vector<8x128xf32> -> vector<8x128xf32>
    %21 = arith.addf %19, %20 : vector<8x128xf32>
    %22 = math.tanh %21 : vector<8x128xf32>
    %c0_16 = arith.constant 0 : index
    %c2 = arith.constant 2 : index
    %c0_17 = arith.constant 0 : index
    %23 = vector.load %arg2[%c0_16, %c2, %c0_17] : memref<8x8x16xf32, #tpu.memory_space<vmem>>, vector<8x1x16xf32>
    %24 = vector.shape_cast %23 : vector<8x1x16xf32> to vector<8x16xf32>
    %cst_18 = arith.constant dense<0.000000e+00> : vector<8x128xf32>
    %25 = tpu.matmul %24, %3, %cst_18 {dimension_numbers = #tpu.dot_dimension_numbers<[1], [0], [0], [1], [0, 0, 1, 1], [], []>} : vector<8x16xf32>, vector<16x128xf32>, vector<8x128xf32> -> vector<8x128xf32>
    %26 = vector.broadcast %5 : vector<1x128xf32> to vector<8x128xf32>
    %27 = arith.addf %25, %26 : vector<8x128xf32>
    %cst_19 = arith.constant dense<0.000000e+00> : vector<8x128xf32>
    %28 = tpu.matmul %22, %4, %cst_19 {dimension_numbers = #tpu.dot_dimension_numbers<[1], [0], [0], [1], [0, 0, 1, 1], [], []>} : vector<8x128xf32>, vector<128x128xf32>, vector<8x128xf32> -> vector<8x128xf32>
    %29 = arith.addf %27, %28 : vector<8x128xf32>
    %30 = math.tanh %29 : vector<8x128xf32>
    %c0_20 = arith.constant 0 : index
    %c3 = arith.constant 3 : index
    %c0_21 = arith.constant 0 : index
    %31 = vector.load %arg2[%c0_20, %c3, %c0_21] : memref<8x8x16xf32, #tpu.memory_space<vmem>>, vector<8x1x16xf32>
    %32 = vector.shape_cast %31 : vector<8x1x16xf32> to vector<8x16xf32>
    %cst_22 = arith.constant dense<0.000000e+00> : vector<8x128xf32>
    %33 = tpu.matmul %32, %3, %cst_22 {dimension_numbers = #tpu.dot_dimension_numbers<[1], [0], [0], [1], [0, 0, 1, 1], [], []>} : vector<8x16xf32>, vector<16x128xf32>, vector<8x128xf32> -> vector<8x128xf32>
    %34 = vector.broadcast %5 : vector<1x128xf32> to vector<8x128xf32>
    %35 = arith.addf %33, %34 : vector<8x128xf32>
    %cst_23 = arith.constant dense<0.000000e+00> : vector<8x128xf32>
    %36 = tpu.matmul %30, %4, %cst_23 {dimension_numbers = #tpu.dot_dimension_numbers<[1], [0], [0], [1], [0, 0, 1, 1], [], []>} : vector<8x128xf32>, vector<128x128xf32>, vector<8x128xf32> -> vector<8x128xf32>
    %37 = arith.addf %35, %36 : vector<8x128xf32>
    %38 = math.tanh %37 : vector<8x128xf32>
    %c0_24 = arith.constant 0 : index
    %c4 = arith.constant 4 : index
    %c0_25 = arith.constant 0 : index
    %39 = vector.load %arg2[%c0_24, %c4, %c0_25] : memref<8x8x16xf32, #tpu.memory_space<vmem>>, vector<8x1x16xf32>
    %40 = vector.shape_cast %39 : vector<8x1x16xf32> to vector<8x16xf32>
    %cst_26 = arith.constant dense<0.000000e+00> : vector<8x128xf32>
    %41 = tpu.matmul %40, %3, %cst_26 {dimension_numbers = #tpu.dot_dimension_numbers<[1], [0], [0], [1], [0, 0, 1, 1], [], []>} : vector<8x16xf32>, vector<16x128xf32>, vector<8x128xf32> -> vector<8x128xf32>
    %42 = vector.broadcast %5 : vector<1x128xf32> to vector<8x128xf32>
    %43 = arith.addf %41, %42 : vector<8x128xf32>
    %cst_27 = arith.constant dense<0.000000e+00> : vector<8x128xf32>
    %44 = tpu.matmul %38, %4, %cst_27 {dimension_numbers = #tpu.dot_dimension_numbers<[1], [0], [0], [1], [0, 0, 1, 1], [], []>} : vector<8x128xf32>, vector<128x128xf32>, vector<8x128xf32> -> vector<8x128xf32>
    %45 = arith.addf %43, %44 : vector<8x128xf32>
    %46 = math.tanh %45 : vector<8x128xf32>
    %c0_28 = arith.constant 0 : index
    %c5 = arith.constant 5 : index
    %c0_29 = arith.constant 0 : index
    %47 = vector.load %arg2[%c0_28, %c5, %c0_29] : memref<8x8x16xf32, #tpu.memory_space<vmem>>, vector<8x1x16xf32>
    %48 = vector.shape_cast %47 : vector<8x1x16xf32> to vector<8x16xf32>
    %cst_30 = arith.constant dense<0.000000e+00> : vector<8x128xf32>
    %49 = tpu.matmul %48, %3, %cst_30 {dimension_numbers = #tpu.dot_dimension_numbers<[1], [0], [0], [1], [0, 0, 1, 1], [], []>} : vector<8x16xf32>, vector<16x128xf32>, vector<8x128xf32> -> vector<8x128xf32>
    %50 = vector.broadcast %5 : vector<1x128xf32> to vector<8x128xf32>
    %51 = arith.addf %49, %50 : vector<8x128xf32>
    %cst_31 = arith.constant dense<0.000000e+00> : vector<8x128xf32>
    %52 = tpu.matmul %46, %4, %cst_31 {dimension_numbers = #tpu.dot_dimension_numbers<[1], [0], [0], [1], [0, 0, 1, 1], [], []>} : vector<8x128xf32>, vector<128x128xf32>, vector<8x128xf32> -> vector<8x128xf32>
    %53 = arith.addf %51, %52 : vector<8x128xf32>
    %54 = math.tanh %53 : vector<8x128xf32>
    %c0_32 = arith.constant 0 : index
    %c6 = arith.constant 6 : index
    %c0_33 = arith.constant 0 : index
    %55 = vector.load %arg2[%c0_32, %c6, %c0_33] : memref<8x8x16xf32, #tpu.memory_space<vmem>>, vector<8x1x16xf32>
    %56 = vector.shape_cast %55 : vector<8x1x16xf32> to vector<8x16xf32>
    %cst_34 = arith.constant dense<0.000000e+00> : vector<8x128xf32>
    %57 = tpu.matmul %56, %3, %cst_34 {dimension_numbers = #tpu.dot_dimension_numbers<[1], [0], [0], [1], [0, 0, 1, 1], [], []>} : vector<8x16xf32>, vector<16x128xf32>, vector<8x128xf32> -> vector<8x128xf32>
    %58 = vector.broadcast %5 : vector<1x128xf32> to vector<8x128xf32>
    %59 = arith.addf %57, %58 : vector<8x128xf32>
    %cst_35 = arith.constant dense<0.000000e+00> : vector<8x128xf32>
    %60 = tpu.matmul %54, %4, %cst_35 {dimension_numbers = #tpu.dot_dimension_numbers<[1], [0], [0], [1], [0, 0, 1, 1], [], []>} : vector<8x128xf32>, vector<128x128xf32>, vector<8x128xf32> -> vector<8x128xf32>
    %61 = arith.addf %59, %60 : vector<8x128xf32>
    %62 = math.tanh %61 : vector<8x128xf32>
    %c0_36 = arith.constant 0 : index
    %c7 = arith.constant 7 : index
    %c0_37 = arith.constant 0 : index
    %63 = vector.load %arg2[%c0_36, %c7, %c0_37] : memref<8x8x16xf32, #tpu.memory_space<vmem>>, vector<8x1x16xf32>
    %64 = vector.shape_cast %63 : vector<8x1x16xf32> to vector<8x16xf32>
    %cst_38 = arith.constant dense<0.000000e+00> : vector<8x128xf32>
    %65 = tpu.matmul %64, %3, %cst_38 {dimension_numbers = #tpu.dot_dimension_numbers<[1], [0], [0], [1], [0, 0, 1, 1], [], []>} : vector<8x16xf32>, vector<16x128xf32>, vector<8x128xf32> -> vector<8x128xf32>
    %66 = vector.broadcast %5 : vector<1x128xf32> to vector<8x128xf32>
    %67 = arith.addf %65, %66 : vector<8x128xf32>
    %cst_39 = arith.constant dense<0.000000e+00> : vector<8x128xf32>
    %68 = tpu.matmul %62, %4, %cst_39 {dimension_numbers = #tpu.dot_dimension_numbers<[1], [0], [0], [1], [0, 0, 1, 1], [], []>} : vector<8x128xf32>, vector<128x128xf32>, vector<8x128xf32> -> vector<8x128xf32>
    %69 = arith.addf %67, %68 : vector<8x128xf32>
    %70 = math.tanh %69 : vector<8x128xf32>
    %c0_40 = arith.constant 0 : index
    %c0_41 = arith.constant 0 : index
    %71 = vector.load %arg8[%c0_40, %c0_41] : memref<8x128xf32, #tpu.memory_space<vmem>>, vector<8x128xf32>
    tpu.vector_store %arg8[%c0_40, %c0_41], %70 {strides = array<i32>} : memref<8x128xf32, #tpu.memory_space<vmem>>, vector<8x128xf32>,
    %c0_i32_42 = arith.constant 0 : i32
    %72 = arith.cmpi eq, %arg1, %c0_i32_42 : i32
    %73 = arith.extui %72 : i1 to i32
    %c0_i32_43 = arith.constant 0 : i32
    %74 = arith.cmpi ne, %73, %c0_i32_43 : i32
    scf.if %74 {
      %c1_44 = arith.constant 1 : index
      %c0_45 = arith.constant 0 : index
      %75 = vector.load %arg5[%c1_44, %c0_45] : memref<2x128xf32, #tpu.memory_space<vmem>>, vector<1x128xf32>
      %76 = vector.broadcast %75 : vector<1x128xf32> to vector<8x128xf32>
      %77 = arith.mulf %70, %76 : vector<8x128xf32>
      %cst_46 = arith.constant dense<0.000000e+00> : vector<8xf32>
      %78 = vector.multi_reduction <add>, %77, %cst_46 [1] : vector<8x128xf32> to vector<8xf32>
      %79 = vector.shape_cast %78 : vector<8xf32> to vector<8x1xf32>
      %c0_47 = arith.constant 0 : index
      %c0_48 = arith.constant 0 : index
      %80 = memref.load %arg6[%c0_47, %c0_48] : memref<1x1xf32, #tpu.memory_space<smem>>
      %81 = vector.broadcast %80 : f32 to vector<8x1xf32>
      %82 = arith.addf %79, %81 : vector<8x1xf32>
      %c0_49 = arith.constant 0 : index
      %c0_50 = arith.constant 0 : index
      %83 = vector.load %arg7[%c0_49, %c0_50] : memref<8x1xf32, #tpu.memory_space<vmem>>, vector<8x1xf32>
      tpu.vector_store %arg7[%c0_49, %c0_50], %82 {strides = array<i32>} : memref<8x1xf32, #tpu.memory_space<vmem>>, vector<8x1xf32>,
    } else {
    }
    return
  }
  func.func @transform_0(%arg0: i32, %arg1: i32) -> (i32, i32, i32) {
    %c0_i32 = arith.constant 0 : i32
    %c0_i32_0 = arith.constant 0 : i32
    return %arg0, %arg1, %c0_i32 : i32, i32, i32
  }
  func.func @transform_1(%arg0: i32, %arg1: i32) -> (i32, i32) {
    %c0_i32 = arith.constant 0 : i32
    %c0_i32_0 = arith.constant 0 : i32
    %c0_i32_1 = arith.constant 0 : i32
    return %c0_i32, %c0_i32_0 : i32, i32
  }
  func.func @transform_2(%arg0: i32, %arg1: i32) -> (i32, i32) {
    %c0_i32 = arith.constant 0 : i32
    %c0_i32_0 = arith.constant 0 : i32
    %c0_i32_1 = arith.constant 0 : i32
    return %c0_i32, %c0_i32_0 : i32, i32
  }
  func.func @transform_3(%arg0: i32, %arg1: i32) -> (i32, i32) {
    %c0_i32 = arith.constant 0 : i32
    %c0_i32_0 = arith.constant 0 : i32
    %c0_i32_1 = arith.constant 0 : i32
    return %c0_i32, %c0_i32_0 : i32, i32
  }
  func.func @transform_4(%arg0: i32, %arg1: i32) -> (i32, i32) {
    %c0_i32 = arith.constant 0 : i32
    %c0_i32_0 = arith.constant 0 : i32
    %c0_i32_1 = arith.constant 0 : i32
    return %c0_i32, %c0_i32_0 : i32, i32
  }
  func.func @transform_5(%arg0: i32, %arg1: i32) -> (i32, i32) {
    %c0_i32 = arith.constant 0 : i32
    %c0_i32_0 = arith.constant 0 : i32
    return %arg0, %c0_i32 : i32, i32
  }
}

</mosaic_0001>

<llo_original>
// kernel: tpu_custom_call.1
$region0: #{tpu_custom_call.1}
  #allocation0 [shape = 'u32[]', space=smem, size = 0x4, offset = 0x4, fixed_abs, tag = 'smem constant byte address 0x4 - core index']
  #allocation1 [shape = 'u32[144,128]{1,0:T(1,128)}', space=vmem, size = 0x12000, scoped, tag = 'internal scratch']
  #allocation2 [shape = 'f32[8,128]{1,0:T(8,128)}', space=vmem, size = 0x1000, scoped, tag = 'scratch operand']
  #allocation3 [shape = 'f32[1,1]{1,0:T(1,128)S(6)}', space=smem, size = 0x200, scoped, tag = 'scoped memory for tpu_custom_call.1']
  %s0 = inlined_call_operand.hbm [shape: f32[8,8,16], index: 0, kind: input, shape index: {}]
  %s1 = inlined_call_operand.hbm [shape: f32[16,128], index: 1, kind: input, shape index: {}]
  %s2 = inlined_call_operand.hbm [shape: f32[128,128], index: 2, kind: input, shape index: {}]
  %s3 = inlined_call_operand.vmem [shape: f32[2,128], index: 3, kind: input, shape index: {}]
  %s4 = inlined_call_operand.<no memory space> [shape: f32[1,1], index: 4, kind: input, shape index: {}]
  %s5 = inlined_call_operand.vmem [shape: f32[8,1], index: 5, kind: output, shape index: {}]
  %s6 = sld [smem:[#allocation0]]
  $region50: #{tpu_custom_call.1} parent=0
    _
  %s8 = ssub.s32 1, %s6
  %s9 = scalar_select 0, %s8, %s6
  %10 = sst [smem:[#allocation3]] %s4
  $region1: #{tpu_custom_call.1} parent=0
    #allocation4 [shape = 'u8[32768]{0}', space=vmem, size = 0x8000, scoped, tag = 'input window, operand 0, single buffered']
    #allocation5 [shape = 's32[1]{0}', space=sflag, size = 0x4, scoped, tag = 'scoped memory for tpu_custom_call.1']
    #allocation6 [shape = 'u8[8192]{0}', space=vmem, size = 0x2000, scoped, tag = 'input window, operand 1, single buffered']
    #allocation7 [shape = 's32[1]{0}', space=sflag, size = 0x4, scoped, tag = 'scoped memory for tpu_custom_call.1']
    #allocation8 [shape = 'u8[65536]{0}', space=vmem, size = 0x10000, scoped, tag = 'input window, operand 2, single buffered']
    %11 = vsyncpa [#allocation5], 0
    %12 = vsyncpa [#allocation7], 0
    // Predicated region
    $region2: #{tpu_custom_call.1} parent=1 // pred_check
      _
    $region3: #{tpu_custom_call.1} parent=1 // pred_check_branch
      %14 = sbr.rel (0) target = $region5
    $region4: #{tpu_custom_call.1} parent=1 // pred_region
      %s16 = ssub.s32 1024, 1024
      %17 = vsyncadd [#allocation5], %s16
      %s18 = sshll.u32 [#allocation4], 4
      %s19 = int_to_ptr.vmem [resolvable:$true] %s18
      %24 = dma.hbm_to_vmem [thread:$0]  %s0, 1024, %s19, [#allocation5], 128, 128, 8
    $region5: #{tpu_custom_call.1} parent=1 // pred_fallthru
      _
    // Predicated region
    $region6: #{tpu_custom_call.1} parent=1 // pred_check
      _
    $region7: #{tpu_custom_call.1} parent=1 // pred_check_branch
      %26 = sbr.rel (0) target = $region9
    $region8: #{tpu_custom_call.1} parent=1 // pred_region
      %s28 = ssub.s32 256, 256
      %29 = vsyncadd [#allocation7], %s28
      %s30 = sshll.u32 [#allocation6], 4
      %s31 = int_to_ptr.vmem [resolvable:$true] %s30
      %36 = dma.hbm_to_vmem [thread:$0]  %s1, 256, %s31, [#allocation7], 128, 128, 8
    $region9: #{tpu_custom_call.1} parent=1 // pred_fallthru
      _
    // Predicated region
    $region10: #{tpu_custom_call.1} parent=1 // pred_check
      _
    $region11: #{tpu_custom_call.1} parent=1 // pred_check_branch
      %38 = sbr.rel (0) target = $region13
    $region12: #{tpu_custom_call.1} parent=1 // pred_region
      %s40 = ssub.s32 2048, 2048
      %41 = vsyncadd [#allocation7], %s40
      %s42 = sshll.u32 [#allocation8], 4
      %s43 = int_to_ptr.vmem [resolvable:$true] %s42
      %48 = dma.hbm_to_vmem [thread:$0]  %s2, 2048, %s43, [#allocation7], 128, 128, 8
    $region13: #{tpu_custom_call.1} parent=1 // pred_fallthru
      _
    // Predicated region
    $region14: #{tpu_custom_call.1} parent=1 // pred_check
      _
    $region15: #{tpu_custom_call.1} parent=1 // pred_check_branch
      %50 = sbr.rel (0) target = $region17
    $region16: #{tpu_custom_call.1} parent=1 // pred_region
      _
    $region17: #{tpu_custom_call.1} parent=1 // pred_fallthru
      _
    // Predicated region
    $region18: #{tpu_custom_call.1} parent=1 // pred_check
      _
    $region19: #{tpu_custom_call.1} parent=1 // pred_check_branch
      %52 = sbr.rel (0) target = $region21
    $region20: #{tpu_custom_call.1} parent=1 // pred_region
      _
    $region21: #{tpu_custom_call.1} parent=1 // pred_fallthru
      _
    // Predicated region
    $region22: #{tpu_custom_call.1} parent=1 // pred_check
      _
    $region23: #{tpu_custom_call.1} parent=1 // pred_check_branch
      %54 = sbr.rel (0) target = $region25
    $region24: #{tpu_custom_call.1} parent=1 // pred_region
      %55 = dma.done [#allocation5], 1024
    $region25: #{tpu_custom_call.1} parent=1 // pred_fallthru
      _
    // Predicated region
    $region26: #{tpu_custom_call.1} parent=1 // pred_check
      _
    $region27: #{tpu_custom_call.1} parent=1 // pred_check_branch
      %57 = sbr.rel (0) target = $region29
    $region28: #{tpu_custom_call.1} parent=1 // pred_region
      %58 = dma.done [#allocation7], 256
    $region29: #{tpu_custom_call.1} parent=1 // pred_fallthru
      _
    // Predicated region
    $region30: #{tpu_custom_call.1} parent=1 // pred_check
      _
    $region31: #{tpu_custom_call.1} parent=1 // pred_check_branch
      %60 = sbr.rel (0) target = $region33
    $region32: #{tpu_custom_call.1} parent=1 // pred_region
      %61 = dma.done [#allocation7], 2048
    $region33: #{tpu_custom_call.1} parent=1 // pred_fallthru
      _
    %p62 = scmp.eq.s32.totalorder 0, 0
    // Predicated region
    $region34: #{tpu_custom_call.1} parent=1 // pred_check
      %p63 = pneg %p62
    $region35: #{tpu_custom_call.1} parent=1 // pred_check_branch
      %65 = sbr.rel (%p63) target = $region37
    $region36: #{tpu_custom_call.1} parent=1 // pred_region
      %66 = vst [vmem:[#allocation2] sm:$0xff] 0.0
    $region37: #{tpu_custom_call.1} parent=1 // pred_fallthru
      _
    %v67 = vld [vmem:[#allocation6] sm:$0xff]
    %v68 = vld [vmem:[#allocation6 + $0x8] sm:$0xff]
    %v69 = vld [vmem:[#allocation8] sm:$0xff]
    %v70 = vld [vmem:[#allocation8 + $0x8] sm:$0xff]
    %v71 = vld [vmem:[#allocation8 + $0x10] sm:$0xff]
    %v72 = vld [vmem:[#allocation8 + $0x18] sm:$0xff]
    %v73 = vld [vmem:[#allocation8 + $0x20] sm:$0xff]
    %v74 = vld [vmem:[#allocation8 + $0x28] sm:$0xff]
    %v75 = vld [vmem:[#allocation8 + $0x30] sm:$0xff]
    %v76 = vld [vmem:[#allocation8 + $0x38] sm:$0xff]
    %v77 = vld [vmem:[#allocation8 + $0x40] sm:$0xff]
    %v78 = vld [vmem:[#allocation8 + $0x48] sm:$0xff]
    %v79 = vld [vmem:[#allocation8 + $0x50] sm:$0xff]
    %v80 = vld [vmem:[#allocation8 + $0x58] sm:$0xff]
    %v81 = vld [vmem:[#allocation8 + $0x60] sm:$0xff]
    %v82 = vld [vmem:[#allocation8 + $0x68] sm:$0xff]
    %v83 = vld [vmem:[#allocation8 + $0x70] sm:$0xff]
    %v84 = vld [vmem:[#allocation8 + $0x78] sm:$0xff]
    %v85 = vld [vmem:[%s3] sm:$0x1]
    %v86 = vld [vmem:[#allocation2] sm:$0xff]
    %v87 = vld [vmem:[#allocation4] sm:$0x1]
    %v88 = vld [vmem:[#allocation4 + $0x8] sm:$0x1]
    %v89 = vld [vmem:[#allocation4 + $0x10] sm:$0x1]
    %v90 = vld [vmem:[#allocation4 + $0x18] sm:$0x1]
    %v91 = vld [vmem:[#allocation4 + $0x20] sm:$0x1]
    %v92 = vld [vmem:[#allocation4 + $0x28] sm:$0x1]
    %v93 = vld [vmem:[#allocation4 + $0x30] sm:$0x1]
    %v94 = vld [vmem:[#allocation4 + $0x38] sm:$0x1]
    %v95 = vlaneseq
    %v96 = vshrl.u32 %v95, 7
    %v97 = vsub.s32 0, %v96
    %v98 = vrot.slane %v85, %v97
    %v107 = vrot.slane %v88, 7
    %vm108 = vcmask 1041409
    %v109 = vsel %vm108, %v107, %v87
    %v110 = vrot.slane %v89, 6
    %vm111 = vcmask 1042434
    %v112 = vsel %vm111, %v110, %v109
    %v113 = vrot.slane %v90, 5
    %vm114 = vcmask 1043459
    %v115 = vsel %vm114, %v113, %v112
    %v116 = vrot.slane %v91, 4
    %vm117 = vcmask 1044484
    %v118 = vsel %vm117, %v116, %v115
    %v119 = vrot.slane %v92, 3
    %vm120 = vcmask 1045509
    %v121 = vsel %vm120, %v119, %v118
    %v122 = vrot.slane %v93, 2
    %vm123 = vcmask 1046534
    %v124 = vsel %vm123, %v122, %v121
    %v125 = vrot.slane %v94, 1
    %vm126 = vcmask 1047559
    %v127 = vsel %vm126, %v125, %v124
    %vm128 = vcmask 130048
    %v129 = vsel %vm128, %v127, 0
    %131 = vmatprep.subr.mxu0 0.0
    %132 = vmatpush1.msra.mxu0 0.0
    %133 = vmatprep.subr.mxu0 0.0
    %134 = vmatpush1.msra.mxu0 0.0
    %135 = vmatprep.subr.mxu0 0.0
    %136 = vmatpush1.msra.mxu0 0.0
    %137 = vmatprep.subr.mxu0 0.0
    %138 = vmatpush1.msra.mxu0 0.0
    %139 = vmatprep.subr.mxu0 0.0
    %140 = vmatpush1.msra.mxu0 0.0
    %141 = vmatprep.subr.mxu0 0.0
    %142 = vmatpush1.msra.mxu0 0.0
    %143 = vmatprep.subr.mxu0 0.0
    %144 = vmatpush1.msra.mxu0 0.0
    %145 = vmatprep.subr.mxu0 0.0
    %146 = vmatpush1.msra.mxu0 0.0
    %147 = vmatprep.subr.mxu0 0.0
    %148 = vmatpush1.msra.mxu0 0.0
    %149 = vmatprep.subr.mxu0 0.0
    %150 = vmatpush1.msra.mxu0 0.0
    %151 = vmatprep.subr.mxu0 0.0
    %152 = vmatpush1.msra.mxu0 0.0
    %153 = vmatprep.subr.mxu0 0.0
    %154 = vmatpush1.msra.mxu0 0.0
    %155 = vmatprep.subr.mxu0 0.0
    %156 = vmatpush1.msra.mxu0 0.0
    %157 = vmatprep.subr.mxu0 0.0
    %158 = vmatpush1.msra.mxu0 0.0
    %159 = vmatprep.subr.mxu0 0.0
    %160 = vmatpush1.msra.mxu0 %v68
    %161 = vmatprep.subr.mxu0 0.0
    %162 = vmatpush1.msra.mxu0 %v67
    %163 = vmatprep.subr.mxu0 0.0
    %164 = vmatpush2.msra.mxu0 0.0
    %165 = vmatprep.subr.mxu0 0.0
    %166 = vmatpush2.msra.mxu0 0.0
    %167 = vmatprep.subr.mxu0 0.0
    %168 = vmatpush2.msra.mxu0 0.0
    %169 = vmatprep.subr.mxu0 0.0
    %170 = vmatpush2.msra.mxu0 0.0
    %171 = vmatprep.subr.mxu0 0.0
    %172 = vmatpush2.msra.mxu0 0.0
    %173 = vmatprep.subr.mxu0 0.0
    %174 = vmatpush2.msra.mxu0 0.0
    %175 = vmatprep.subr.mxu0 0.0
    %176 = vmatpush2.msra.mxu0 0.0
    %177 = vmatprep.subr.mxu0 0.0
    %178 = vmatpush2.msra.mxu0 0.0
    %179 = vmatprep.subr.mxu0 0.0
    %180 = vmatpush2.msra.mxu0 0.0
    %181 = vmatprep.subr.mxu0 0.0
    %182 = vmatpush2.msra.mxu0 0.0
    %183 = vmatprep.subr.mxu0 0.0
    %184 = vmatpush2.msra.mxu0 0.0
    %185 = vmatprep.subr.mxu0 0.0
    %186 = vmatpush2.msra.mxu0 0.0
    %187 = vmatprep.subr.mxu0 0.0
    %188 = vmatpush2.msra.mxu0 0.0
    %189 = vmatprep.subr.mxu0 0.0
    %190 = vmatpush2.msra.mxu0 0.0
    %191 = vmatprep.subr.mxu0 0.0
    %192 = vmatpush2.msra.mxu0 0.0
    %193 = vmatprep.subr.mxu0 0.0
    %194 = vmatpush2.msra.mxu0 0.0
    %195 = vmatprep.mubr.f32.mxu0 0.0
    %196 = vmatmul.mubr.f32.gmra.mxu0 %v129
    %v197 = vpop.f32.mrf.mxu0
    %v198 = vadd.f32 %v98, %v197
    %v199 = vpop.f32.mrf.mxu0
    %200 = vdwg.mxu0
    %201 = vmatprep.subr.mxu0 0.0
    %202 = vmatpush1.msra.mxu0 %v84
    %203 = vmatprep.subr.mxu0 0.0
    %204 = vmatpush1.msra.mxu0 %v83
    %205 = vmatprep.subr.mxu0 0.0
    %206 = vmatpush1.msra.mxu0 %v82
    %207 = vmatprep.subr.mxu0 0.0
    %208 = vmatpush1.msra.mxu0 %v81
    %209 = vmatprep.subr.mxu0 0.0
    %210 = vmatpush1.msra.mxu0 %v80
    %211 = vmatprep.subr.mxu0 0.0
    %212 = vmatpush1.msra.mxu0 %v79
    %213 = vmatprep.subr.mxu0 0.0
    %214 = vmatpush1.msra.mxu0 %v78
    %215 = vmatprep.subr.mxu0 0.0
    %216 = vmatpush1.msra.mxu0 %v77
    %217 = vmatprep.subr.mxu0 0.0
    %218 = vmatpush1.msra.mxu0 %v76
    %219 = vmatprep.subr.mxu0 0.0
    %220 = vmatpush1.msra.mxu0 %v75
    %221 = vmatprep.subr.mxu0 0.0
    %222 = vmatpush1.msra.mxu0 %v74
    %223 = vmatprep.subr.mxu0 0.0
    %224 = vmatpush1.msra.mxu0 %v73
    %225 = vmatprep.subr.mxu0 0.0
    %226 = vmatpush1.msra.mxu0 %v72
    %227 = vmatprep.subr.mxu0 0.0
    %228 = vmatpush1.msra.mxu0 %v71
    %229 = vmatprep.subr.mxu0 0.0
    %230 = vmatpush1.msra.mxu0 %v70
    %231 = vmatprep.subr.mxu0 0.0
    %232 = vmatpush1.msra.mxu0 %v69
    %233 = vmatprep.subr.mxu0 0.0
    %234 = vmatpush2.msra.mxu0 0.0
    %235 = vmatprep.subr.mxu0 0.0
    %236 = vmatpush2.msra.mxu0 0.0
    %237 = vmatprep.subr.mxu0 0.0
    %238 = vmatpush2.msra.mxu0 0.0
    %239 = vmatprep.subr.mxu0 0.0
    %240 = vmatpush2.msra.mxu0 0.0
    %241 = vmatprep.subr.mxu0 0.0
    %242 = vmatpush2.msra.mxu0 0.0
    %243 = vmatprep.subr.mxu0 0.0
    %244 = vmatpush2.msra.mxu0 0.0
    %245 = vmatprep.subr.mxu0 0.0
    %246 = vmatpush2.msra.mxu0 0.0
    %247 = vmatprep.subr.mxu0 0.0
    %248 = vmatpush2.msra.mxu0 0.0
    %249 = vmatprep.subr.mxu0 0.0
    %250 = vmatpush2.msra.mxu0 0.0
    %251 = vmatprep.subr.mxu0 0.0
    %252 = vmatpush2.msra.mxu0 0.0
    %253 = vmatprep.subr.mxu0 0.0
    %254 = vmatpush2.msra.mxu0 0.0
    %255 = vmatprep.subr.mxu0 0.0
    %256 = vmatpush2.msra.mxu0 0.0
    %257 = vmatprep.subr.mxu0 0.0
    %258 = vmatpush2.msra.mxu0 0.0
    %259 = vmatprep.subr.mxu0 0.0
    %260 = vmatpush2.msra.mxu0 0.0
    %261 = vmatprep.subr.mxu0 0.0
    %262 = vmatpush2.msra.mxu0 0.0
    %263 = vmatprep.subr.mxu0 0.0
    %264 = vmatpush2.msra.mxu0 0.0
    %265 = vmatprep.mubr.f32.mxu0 0.0
    %266 = vmatmul.mubr.f32.gmra.mxu0 %v86
    %v267 = vpop.f32.mrf.mxu0
    %v268 = vadd.f32 0.0, %v267
    %v269 = vpop.f32.mrf.mxu0
    %270 = vdwg.mxu0
    %v271 = vadd.f32 %v198, %v268
    %v272 = vtanh.pop %v271
    %v273 = vld [vmem:[#allocation4 + $0x1] sm:$0x1]
    %v274 = vld [vmem:[#allocation4 + $0x9] sm:$0x1]
    %v275 = vld [vmem:[#allocation4 + $0x11] sm:$0x1]
    %v276 = vld [vmem:[#allocation4 + $0x19] sm:$0x1]
    %v277 = vld [vmem:[#allocation4 + $0x21] sm:$0x1]
    %v278 = vld [vmem:[#allocation4 + $0x29] sm:$0x1]
    %v279 = vld [vmem:[#allocation4 + $0x31] sm:$0x1]
    %v280 = vld [vmem:[#allocation4 + $0x39] sm:$0x1]
    %v289 = vrot.slane %v274, 7
    %v290 = vsel %vm108, %v289, %v273
    %v291 = vrot.slane %v275, 6
    %v292 = vsel %vm111, %v291, %v290
    %v293 = vrot.slane %v276, 5
    %v294 = vsel %vm114, %v293, %v292
    %v295 = vrot.slane %v277, 4
    %v296 = vsel %vm117, %v295, %v294
    %v297 = vrot.slane %v278, 3
    %v298 = vsel %vm120, %v297, %v296
    %v299 = vrot.slane %v279, 2
    %v300 = vsel %vm123, %v299, %v298
    %v301 = vrot.slane %v280, 1
    %v302 = vsel %vm126, %v301, %v300
    %v303 = vsel %vm128, %v302, 0
    %305 = vmatprep.subr.mxu0 0.0
    %306 = vmatpush1.msra.mxu0 0.0
    %307 = vmatprep.subr.mxu0 0.0
    %308 = vmatpush1.msra.mxu0 0.0
    %309 = vmatprep.subr.mxu0 0.0
    %310 = vmatpush1.msra.mxu0 0.0
    %311 = vmatprep.subr.mxu0 0.0
    %312 = vmatpush1.msra.mxu0 0.0
    %313 = vmatprep.subr.mxu0 0.0
    %314 = vmatpush1.msra.mxu0 0.0
    %315 = vmatprep.subr.mxu0 0.0
    %316 = vmatpush1.msra.mxu0 0.0
    %317 = vmatprep.subr.mxu0 0.0
    %318 = vmatpush1.msra.mxu0 0.0
    %319 = vmatprep.subr.mxu0 0.0
    %320 = vmatpush1.msra.mxu0 0.0
    %321 = vmatprep.subr.mxu0 0.0
    %322 = vmatpush1.msra.mxu0 0.0
    %323 = vmatprep.subr.mxu0 0.0
    %324 = vmatpush1.msra.mxu0 0.0
    %325 = vmatprep.subr.mxu0 0.0
    %326 = vmatpush1.msra.mxu0 0.0
    %327 = vmatprep.subr.mxu0 0.0
    %328 = vmatpush1.msra.mxu0 0.0
    %329 = vmatprep.subr.mxu0 0.0
    %330 = vmatpush1.msra.mxu0 0.0
    %331 = vmatprep.subr.mxu0 0.0
    %332 = vmatpush1.msra.mxu0 0.0
    %333 = vmatprep.subr.mxu0 0.0
    %334 = vmatpush1.msra.mxu0 %v68
    %335 = vmatprep.subr.mxu0 0.0
    %336 = vmatpush1.msra.mxu0 %v67
    %337 = vmatprep.subr.mxu0 0.0
    %338 = vmatpush2.msra.mxu0 0.0
    %339 = vmatprep.subr.mxu0 0.0
    %340 = vmatpush2.msra.mxu0 0.0
    %341 = vmatprep.subr.mxu0 0.0
    %342 = vmatpush2.msra.mxu0 0.0
    %343 = vmatprep.subr.mxu0 0.0
    %344 = vmatpush2.msra.mxu0 0.0
    %345 = vmatprep.subr.mxu0 0.0
    %346 = vmatpush2.msra.mxu0 0.0
    %347 = vmatprep.subr.mxu0 0.0
    %348 = vmatpush2.msra.mxu0 0.0
    %349 = vmatprep.subr.mxu0 0.0
    %350 = vmatpush2.msra.mxu0 0.0
    %351 = vmatprep.subr.mxu0 0.0
    %352 = vmatpush2.msra.mxu0 0.0
    %353 = vmatprep.subr.mxu0 0.0
    %354 = vmatpush2.msra.mxu0 0.0
    %355 = vmatprep.subr.mxu0 0.0
    %356 = vmatpush2.msra.mxu0 0.0
    %357 = vmatprep.subr.mxu0 0.0
    %358 = vmatpush2.msra.mxu0 0.0
    %359 = vmatprep.subr.mxu0 0.0
    %360 = vmatpush2.msra.mxu0 0.0
    %361 = vmatprep.subr.mxu0 0.0
    %362 = vmatpush2.msra.mxu0 0.0
    %363 = vmatprep.subr.mxu0 0.0
    %364 = vmatpush2.msra.mxu0 0.0
    %365 = vmatprep.subr.mxu0 0.0
    %366 = vmatpush2.msra.mxu0 0.0
    %367 = vmatprep.subr.mxu0 0.0
    %368 = vmatpush2.msra.mxu0 0.0
    %369 = vmatprep.mubr.f32.mxu0 0.0
    %370 = vmatmul.mubr.f32.gmra.mxu0 %v303
    %v371 = vpop.f32.mrf.mxu0
    %v372 = vadd.f32 %v98, %v371
    %v373 = vpop.f32.mrf.mxu0
    %374 = vdwg.mxu0
    %375 = vmatprep.subr.mxu0 0.0
    %376 = vmatpush1.msra.mxu0 %v84
    %377 = vmatprep.subr.mxu0 0.0
    %378 = vmatpush1.msra.mxu0 %v83
    %379 = vmatprep.subr.mxu0 0.0
    %380 = vmatpush1.msra.mxu0 %v82
    %381 = vmatprep.subr.mxu0 0.0
    %382 = vmatpush1.msra.mxu0 %v81
    %383 = vmatprep.subr.mxu0 0.0
    %384 = vmatpush1.msra.mxu0 %v80
    %385 = vmatprep.subr.mxu0 0.0
    %386 = vmatpush1.msra.mxu0 %v79
    %387 = vmatprep.subr.mxu0 0.0
    %388 = vmatpush1.msra.mxu0 %v78
    %389 = vmatprep.subr.mxu0 0.0
    %390 = vmatpush1.msra.mxu0 %v77
    %391 = vmatprep.subr.mxu0 0.0
    %392 = vmatpush1.msra.mxu0 %v76
    %393 = vmatprep.subr.mxu0 0.0
    %394 = vmatpush1.msra.mxu0 %v75
    %395 = vmatprep.subr.mxu0 0.0
    %396 = vmatpush1.msra.mxu0 %v74
    %397 = vmatprep.subr.mxu0 0.0
    %398 = vmatpush1.msra.mxu0 %v73
    %399 = vmatprep.subr.mxu0 0.0
    %400 = vmatpush1.msra.mxu0 %v72
    %401 = vmatprep.subr.mxu0 0.0
    %402 = vmatpush1.msra.mxu0 %v71
    %403 = vmatprep.subr.mxu0 0.0
    %404 = vmatpush1.msra.mxu0 %v70
    %405 = vmatprep.subr.mxu0 0.0
    %406 = vmatpush1.msra.mxu0 %v69
    %407 = vmatprep.subr.mxu0 0.0
    %408 = vmatpush2.msra.mxu0 0.0
    %409 = vmatprep.subr.mxu0 0.0
    %410 = vmatpush2.msra.mxu0 0.0
    %411 = vmatprep.subr.mxu0 0.0
    %412 = vmatpush2.msra.mxu0 0.0
    %413 = vmatprep.subr.mxu0 0.0
    %414 = vmatpush2.msra.mxu0 0.0
    %415 = vmatprep.subr.mxu0 0.0
    %416 = vmatpush2.msra.mxu0 0.0
    %417 = vmatprep.subr.mxu0 0.0
    %418 = vmatpush2.msra.mxu0 0.0
    %419 = vmatprep.subr.mxu0 0.0
    %420 = vmatpush2.msra.mxu0 0.0
    %421 = vmatprep.subr.mxu0 0.0
    %422 = vmatpush2.msra.mxu0 0.0
    %423 = vmatprep.subr.mxu0 0.0
    %424 = vmatpush2.msra.mxu0 0.0
    %425 = vmatprep.subr.mxu0 0.0
    %426 = vmatpush2.msra.mxu0 0.0
    %427 = vmatprep.subr.mxu0 0.0
    %428 = vmatpush2.msra.mxu0 0.0
    %429 = vmatprep.subr.mxu0 0.0
    %430 = vmatpush2.msra.mxu0 0.0
    %431 = vmatprep.subr.mxu0 0.0
    %432 = vmatpush2.msra.mxu0 0.0
    %433 = vmatprep.subr.mxu0 0.0
    %434 = vmatpush2.msra.mxu0 0.0
    %435 = vmatprep.subr.mxu0 0.0
    %436 = vmatpush2.msra.mxu0 0.0
    %437 = vmatprep.subr.mxu0 0.0
    %438 = vmatpush2.msra.mxu0 0.0
    %439 = vmatprep.mubr.f32.mxu0 0.0
    %440 = vmatmul.mubr.f32.gmra.mxu0 %v272
    %v441 = vpop.f32.mrf.mxu0
    %v442 = vadd.f32 0.0, %v441
    %v443 = vpop.f32.mrf.mxu0
    %444 = vdwg.mxu0
    %v445 = vadd.f32 %v372, %v442
    %v446 = vtanh.pop %v445
    %v447 = vld [vmem:[#allocation4 + $0x2] sm:$0x1]
    %v448 = vld [vmem:[#allocation4 + $0xa] sm:$0x1]
    %v449 = vld [vmem:[#allocation4 + $0x12] sm:$0x1]
    %v450 = vld [vmem:[#allocation4 + $0x1a] sm:$0x1]
    %v451 = vld [vmem:[#allocation4 + $0x22] sm:$0x1]
    %v452 = vld [vmem:[#allocation4 + $0x2a] sm:$0x1]
    %v453 = vld [vmem:[#allocation4 + $0x32] sm:$0x1]
    %v454 = vld [vmem:[#allocation4 + $0x3a] sm:$0x1]
    %v463 = vrot.slane %v448, 7
    %v464 = vsel %vm108, %v463, %v447
    %v465 = vrot.slane %v449, 6
    %v466 = vsel %vm111, %v465, %v464
    %v467 = vrot.slane %v450, 5
    %v468 = vsel %vm114, %v467, %v466
    %v469 = vrot.slane %v451, 4
    %v470 = vsel %vm117, %v469, %v468
    %v471 = vrot.slane %v452, 3
    %v472 = vsel %vm120, %v471, %v470
    %v473 = vrot.slane %v453, 2
    %v474 = vsel %vm123, %v473, %v472
    %v475 = vrot.slane %v454, 1
    %v476 = vsel %vm126, %v475, %v474
    %v477 = vsel %vm128, %v476, 0
    %479 = vmatprep.subr.mxu0 0.0
    %480 = vmatpush1.msra.mxu0 0.0
    %481 = vmatprep.subr.mxu0 0.0
    %482 = vmatpush1.msra.mxu0 0.0
    %483 = vmatprep.subr.mxu0 0.0
    %484 = vmatpush1.msra.mxu0 0.0
    %485 = vmatprep.subr.mxu0 0.0
    %486 = vmatpush1.msra.mxu0 0.0
    %487 = vmatprep.subr.mxu0 0.0
    %488 = vmatpush1.msra.mxu0 0.0
    %489 = vmatprep.subr.mxu0 0.0
    %490 = vmatpush1.msra.mxu0 0.0
    %491 = vmatprep.subr.mxu0 0.0
    %492 = vmatpush1.msra.mxu0 0.0
    %493 = vmatprep.subr.mxu0 0.0
    %494 = vmatpush1.msra.mxu0 0.0
    %495 = vmatprep.subr.mxu0 0.0
    %496 = vmatpush1.msra.mxu0 0.0
    %497 = vmatprep.subr.mxu0 0.0
    %498 = vmatpush1.msra.mxu0 0.0
    %499 = vmatprep.subr.mxu0 0.0
    %500 = vmatpush1.msra.mxu0 0.0
    %501 = vmatprep.subr.mxu0 0.0
    %502 = vmatpush1.msra.mxu0 0.0
    %503 = vmatprep.subr.mxu0 0.0
    %504 = vmatpush1.msra.mxu0 0.0
    %505 = vmatprep.subr.mxu0 0.0
    %506 = vmatpush1.msra.mxu0 0.0
    %507 = vmatprep.subr.mxu0 0.0
    %508 = vmatpush1.msra.mxu0 %v68
    %509 = vmatprep.subr.mxu0 0.0
    %510 = vmatpush1.msra.mxu0 %v67
    %511 = vmatprep.subr.mxu0 0.0
    %512 = vmatpush2.msra.mxu0 0.0
    %513 = vmatprep.subr.mxu0 0.0
    %514 = vmatpush2.msra.mxu0 0.0
    %515 = vmatprep.subr.mxu0 0.0
    %516 = vmatpush2.msra.mxu0 0.0
    %517 = vmatprep.subr.mxu0 0.0
    %518 = vmatpush2.msra.mxu0 0.0
    %519 = vmatprep.subr.mxu0 0.0
    %520 = vmatpush2.msra.mxu0 0.0
    %521 = vmatprep.subr.mxu0 0.0
    %522 = vmatpush2.msra.mxu0 0.0
    %523 = vmatprep.subr.mxu0 0.0
    %524 = vmatpush2.msra.mxu0 0.0
    %525 = vmatprep.subr.mxu0 0.0
    %526 = vmatpush2.msra.mxu0 0.0
    %527 = vmatprep.subr.mxu0 0.0
    %528 = vmatpush2.msra.mxu0 0.0
    %529 = vmatprep.subr.mxu0 0.0
    %530 = vmatpush2.msra.mxu0 0.0
    %531 = vmatprep.subr.mxu0 0.0
    %532 = vmatpush2.msra.mxu0 0.0
    %533 = vmatprep.subr.mxu0 0.0
    %534 = vmatpush2.msra.mxu0 0.0
    %535 = vmatprep.subr.mxu0 0.0
    %536 = vmatpush2.msra.mxu0 0.0
    %537 = vmatprep.subr.mxu0 0.0
    %538 = vmatpush2.msra.mxu0 0.0
    %539 = vmatprep.subr.mxu0 0.0
    %540 = vmatpush2.msra.mxu0 0.0
    %541 = vmatprep.subr.mxu0 0.0
    %542 = vmatpush2.msra.mxu0 0.0
    %543 = vmatprep.mubr.f32.mxu0 0.0
    %544 = vmatmul.mubr.f32.gmra.mxu0 %v477
    %v545 = vpop.f32.mrf.mxu0
    %v546 = vadd.f32 %v98, %v545
    %v547 = vpop.f32.mrf.mxu0
    %548 = vdwg.mxu0
    %549 = vmatprep.subr.mxu0 0.0
    %550 = vmatpush1.msra.mxu0 %v84
    %551 = vmatprep.subr.mxu0 0.0
    %552 = vmatpush1.msra.mxu0 %v83
    %553 = vmatprep.subr.mxu0 0.0
    %554 = vmatpush1.msra.mxu0 %v82
    %555 = vmatprep.subr.mxu0 0.0
    %556 = vmatpush1.msra.mxu0 %v81
    %557 = vmatprep.subr.mxu0 0.0
    %558 = vmatpush1.msra.mxu0 %v80
    %559 = vmatprep.subr.mxu0 0.0
    %560 = vmatpush1.msra.mxu0 %v79
    %561 = vmatprep.subr.mxu0 0.0
    %562 = vmatpush1.msra.mxu0 %v78
    %563 = vmatprep.subr.mxu0 0.0
    %564 = vmatpush1.msra.mxu0 %v77
    %565 = vmatprep.subr.mxu0 0.0
    %566 = vmatpush1.msra.mxu0 %v76
    %567 = vmatprep.subr.mxu0 0.0
    %568 = vmatpush1.msra.mxu0 %v75
    %569 = vmatprep.subr.mxu0 0.0
    %570 = vmatpush1.msra.mxu0 %v74
    %571 = vmatprep.subr.mxu0 0.0
    %572 = vmatpush1.msra.mxu0 %v73
    %573 = vmatprep.subr.mxu0 0.0
    %574 = vmatpush1.msra.mxu0 %v72
    %575 = vmatprep.subr.mxu0 0.0
    %576 = vmatpush1.msra.mxu0 %v71
    %577 = vmatprep.subr.mxu0 0.0
    %578 = vmatpush1.msra.mxu0 %v70
    %579 = vmatprep.subr.mxu0 0.0
    %580 = vmatpush1.msra.mxu0 %v69
    %581 = vmatprep.subr.mxu0 0.0
    %582 = vmatpush2.msra.mxu0 0.0
    %583 = vmatprep.subr.mxu0 0.0
    %584 = vmatpush2.msra.mxu0 0.0
    %585 = vmatprep.subr.mxu0 0.0
    %586 = vmatpush2.msra.mxu0 0.0
    %587 = vmatprep.subr.mxu0 0.0
    %588 = vmatpush2.msra.mxu0 0.0
    %589 = vmatprep.subr.mxu0 0.0
    %590 = vmatpush2.msra.mxu0 0.0
    %591 = vmatprep.subr.mxu0 0.0
    %592 = vmatpush2.msra.mxu0 0.0
    %593 = vmatprep.subr.mxu0 0.0
    %594 = vmatpush2.msra.mxu0 0.0
    %595 = vmatprep.subr.mxu0 0.0
    %596 = vmatpush2.msra.mxu0 0.0
    %597 = vmatprep.subr.mxu0 0.0
    %598 = vmatpush2.msra.mxu0 0.0
    %599 = vmatprep.subr.mxu0 0.0
    %600 = vmatpush2.msra.mxu0 0.0
    %601 = vmatprep.subr.mxu0 0.0
    %602 = vmatpush2.msra.mxu0 0.0
    %603 = vmatprep.subr.mxu0 0.0
    %604 = vmatpush2.msra.mxu0 0.0
    %605 = vmatprep.subr.mxu0 0.0
    %606 = vmatpush2.msra.mxu0 0.0
    %607 = vmatprep.subr.mxu0 0.0
    %608 = vmatpush2.msra.mxu0 0.0
    %609 = vmatprep.subr.mxu0 0.0
    %610 = vmatpush2.msra.mxu0 0.0
    %611 = vmatprep.subr.mxu0 0.0
    %612 = vmatpush2.msra.mxu0 0.0
    %613 = vmatprep.mubr.f32.mxu0 0.0
    %614 = vmatmul.mubr.f32.gmra.mxu0 %v446
    %v615 = vpop.f32.mrf.mxu0
    %v616 = vadd.f32 0.0, %v615
    %v617 = vpop.f32.mrf.mxu0
    %618 = vdwg.mxu0
    %v619 = vadd.f32 %v546, %v616
    %v620 = vtanh.pop %v619
    %v621 = vld [vmem:[#allocation4 + $0x3] sm:$0x1]
    %v622 = vld [vmem:[#allocation4 + $0xb] sm:$0x1]
    %v623 = vld [vmem:[#allocation4 + $0x13] sm:$0x1]
    %v624 = vld [vmem:[#allocation4 + $0x1b] sm:$0x1]
    %v625 = vld [vmem:[#allocation4 + $0x23] sm:$0x1]
    %v626 = vld [vmem:[#allocation4 + $0x2b] sm:$0x1]
    %v627 = vld [vmem:[#allocation4 + $0x33] sm:$0x1]
    %v628 = vld [vmem:[#allocation4 + $0x3b] sm:$0x1]
    %v637 = vrot.slane %v622, 7
    %v638 = vsel %vm108, %v637, %v621
    %v639 = vrot.slane %v623, 6
    %v640 = vsel %vm111, %v639, %v638
    %v641 = vrot.slane %v624, 5
    %v642 = vsel %vm114, %v641, %v640
    %v643 = vrot.slane %v625, 4
    %v644 = vsel %vm117, %v643, %v642
    %v645 = vrot.slane %v626, 3
    %v646 = vsel %vm120, %v645, %v644
    %v647 = vrot.slane %v627, 2
    %v648 = vsel %vm123, %v647, %v646
    %v649 = vrot.slane %v628, 1
    %v650 = vsel %vm126, %v649, %v648
    %v651 = vsel %vm128, %v650, 0
    %653 = vmatprep.subr.mxu0 0.0
    %654 = vmatpush1.msra.mxu0 0.0
    %655 = vmatprep.subr.mxu0 0.0
    %656 = vmatpush1.msra.mxu0 0.0
    %657 = vmatprep.subr.mxu0 0.0
    %658 = vmatpush1.msra.mxu0 0.0
    %659 = vmatprep.subr.mxu0 0.0
    %660 = vmatpush1.msra.mxu0 0.0
    %661 = vmatprep.subr.mxu0 0.0
    %662 = vmatpush1.msra.mxu0 0.0
    %663 = vmatprep.subr.mxu0 0.0
    %664 = vmatpush1.msra.mxu0 0.0
    %665 = vmatprep.subr.mxu0 0.0
    %666 = vmatpush1.msra.mxu0 0.0
    %667 = vmatprep.subr.mxu0 0.0
    %668 = vmatpush1.msra.mxu0 0.0
    %669 = vmatprep.subr.mxu0 0.0
    %670 = vmatpush1.msra.mxu0 0.0
    %671 = vmatprep.subr.mxu0 0.0
    %672 = vmatpush1.msra.mxu0 0.0
    %673 = vmatprep.subr.mxu0 0.0
    %674 = vmatpush1.msra.mxu0 0.0
    %675 = vmatprep.subr.mxu0 0.0
    %676 = vmatpush1.msra.mxu0 0.0
    %677 = vmatprep.subr.mxu0 0.0
    %678 = vmatpush1.msra.mxu0 0.0
    %679 = vmatprep.subr.mxu0 0.0
    %680 = vmatpush1.msra.mxu0 0.0
    %681 = vmatprep.subr.mxu0 0.0
    %682 = vmatpush1.msra.mxu0 %v68
    %683 = vmatprep.subr.mxu0 0.0
    %684 = vmatpush1.msra.mxu0 %v67
    %685 = vmatprep.subr.mxu0 0.0
    %686 = vmatpush2.msra.mxu0 0.0
    %687 = vmatprep.subr.mxu0 0.0
    %688 = vmatpush2.msra.mxu0 0.0
    %689 = vmatprep.subr.mxu0 0.0
    %690 = vmatpush2.msra.mxu0 0.0
    %691 = vmatprep.subr.mxu0 0.0
    %692 = vmatpush2.msra.mxu0 0.0
    %693 = vmatprep.subr.mxu0 0.0
    %694 = vmatpush2.msra.mxu0 0.0
    %695 = vmatprep.subr.mxu0 0.0
    %696 = vmatpush2.msra.mxu0 0.0
    %697 = vmatprep.subr.mxu0 0.0
    %698 = vmatpush2.msra.mxu0 0.0
    %699 = vmatprep.subr.mxu0 0.0
    %700 = vmatpush2.msra.mxu0 0.0
    %701 = vmatprep.subr.mxu0 0.0
    %702 = vmatpush2.msra.mxu0 0.0
    %703 = vmatprep.subr.mxu0 0.0
    %704 = vmatpush2.msra.mxu0 0.0
    %705 = vmatprep.subr.mxu0 0.0
    %706 = vmatpush2.msra.mxu0 0.0
    %707 = vmatprep.subr.mxu0 0.0
    %708 = vmatpush2.msra.mxu0 0.0
    %709 = vmatprep.subr.mxu0 0.0
    %710 = vmatpush2.msra.mxu0 0.0
    %711 = vmatprep.subr.mxu0 0.0
    %712 = vmatpush2.msra.mxu0 0.0
    %713 = vmatprep.subr.mxu0 0.0
    %714 = vmatpush2.msra.mxu0 0.0
    %715 = vmatprep.subr.mxu0 0.0
    %716 = vmatpush2.msra.mxu0 0.0
    %717 = vmatprep.mubr.f32.mxu0 0.0
    %718 = vmatmul.mubr.f32.gmra.mxu0 %v651
    %v719 = vpop.f32.mrf.mxu0
    %v720 = vadd.f32 %v98, %v719
    %v721 = vpop.f32.mrf.mxu0
    %722 = vdwg.mxu0
    %723 = vmatprep.subr.mxu0 0.0
    %724 = vmatpush1.msra.mxu0 %v84
    %725 = vmatprep.subr.mxu0 0.0
    %726 = vmatpush1.msra.mxu0 %v83
    %727 = vmatprep.subr.mxu0 0.0
    %728 = vmatpush1.msra.mxu0 %v82
    %729 = vmatprep.subr.mxu0 0.0
    %730 = vmatpush1.msra.mxu0 %v81
    %731 = vmatprep.subr.mxu0 0.0
    %732 = vmatpush1.msra.mxu0 %v80
    %733 = vmatprep.subr.mxu0 0.0
    %734 = vmatpush1.msra.mxu0 %v79
    %735 = vmatprep.subr.mxu0 0.0
    %736 = vmatpush1.msra.mxu0 %v78
    %737 = vmatprep.subr.mxu0 0.0
    %738 = vmatpush1.msra.mxu0 %v77
    %739 = vmatprep.subr.mxu0 0.0
    %740 = vmatpush1.msra.mxu0 %v76
    %741 = vmatprep.subr.mxu0 0.0
    %742 = vmatpush1.msra.mxu0 %v75
    %743 = vmatprep.subr.mxu0 0.0
    %744 = vmatpush1.msra.mxu0 %v74
    %745 = vmatprep.subr.mxu0 0.0
    %746 = vmatpush1.msra.mxu0 %v73
    %747 = vmatprep.subr.mxu0 0.0
    %748 = vmatpush1.msra.mxu0 %v72
    %749 = vmatprep.subr.mxu0 0.0
    %750 = vmatpush1.msra.mxu0 %v71
    %751 = vmatprep.subr.mxu0 0.0
    %752 = vmatpush1.msra.mxu0 %v70
    %753 = vmatprep.subr.mxu0 0.0
    %754 = vmatpush1.msra.mxu0 %v69
    %755 = vmatprep.subr.mxu0 0.0
    %756 = vmatpush2.msra.mxu0 0.0
    %757 = vmatprep.subr.mxu0 0.0
    %758 = vmatpush2.msra.mxu0 0.0
    %759 = vmatprep.subr.mxu0 0.0
    %760 = vmatpush2.msra.mxu0 0.0
    %761 = vmatprep.subr.mxu0 0.0
    %762 = vmatpush2.msra.mxu0 0.0
    %763 = vmatprep.subr.mxu0 0.0
    %764 = vmatpush2.msra.mxu0 0.0
    %765 = vmatprep.subr.mxu0 0.0
    %766 = vmatpush2.msra.mxu0 0.0
    %767 = vmatprep.subr.mxu0 0.0
    %768 = vmatpush2.msra.mxu0 0.0
    %769 = vmatprep.subr.mxu0 0.0
    %770 = vmatpush2.msra.mxu0 0.0
    %771 = vmatprep.subr.mxu0 0.0
    %772 = vmatpush2.msra.mxu0 0.0
    %773 = vmatprep.subr.mxu0 0.0
    %774 = vmatpush2.msra.mxu0 0.0
    %775 = vmatprep.subr.mxu0 0.0
    %776 = vmatpush2.msra.mxu0 0.0
    %777 = vmatprep.subr.mxu0 0.0
    %778 = vmatpush2.msra.mxu0 0.0
    %779 = vmatprep.subr.mxu0 0.0
    %780 = vmatpush2.msra.mxu0 0.0
    %781 = vmatprep.subr.mxu0 0.0
    %782 = vmatpush2.msra.mxu0 0.0
    %783 = vmatprep.subr.mxu0 0.0
    %784 = vmatpush2.msra.mxu0 0.0
    %785 = vmatprep.subr.mxu0 0.0
    %786 = vmatpush2.msra.mxu0 0.0
    %787 = vmatprep.mubr.f32.mxu0 0.0
    %788 = vmatmul.mubr.f32.gmra.mxu0 %v620
    %v789 = vpop.f32.mrf.mxu0
    %v790 = vadd.f32 0.0, %v789
    %v791 = vpop.f32.mrf.mxu0
    %792 = vdwg.mxu0
    %v793 = vadd.f32 %v720, %v790
    %v794 = vtanh.pop %v793
    %v795 = vld [vmem:[#allocation4 + $0x4] sm:$0x1]
    %v796 = vld [vmem:[#allocation4 + $0xc] sm:$0x1]
    %v797 = vld [vmem:[#allocation4 + $0x14] sm:$0x1]
    %v798 = vld [vmem:[#allocation4 + $0x1c] sm:$0x1]
    %v799 = vld [vmem:[#allocation4 + $0x24] sm:$0x1]
    %v800 = vld [vmem:[#allocation4 + $0x2c] sm:$0x1]
    %v801 = vld [vmem:[#allocation4 + $0x34] sm:$0x1]
    %v802 = vld [vmem:[#allocation4 + $0x3c] sm:$0x1]
    %v811 = vrot.slane %v796, 7
    %v812 = vsel %vm108, %v811, %v795
    %v813 = vrot.slane %v797, 6
    %v814 = vsel %vm111, %v813, %v812
    %v815 = vrot.slane %v798, 5
    %v816 = vsel %vm114, %v815, %v814
    %v817 = vrot.slane %v799, 4
    %v818 = vsel %vm117, %v817, %v816
    %v819 = vrot.slane %v800, 3
    %v820 = vsel %vm120, %v819, %v818
    %v821 = vrot.slane %v801, 2
    %v822 = vsel %vm123, %v821, %v820
    %v823 = vrot.slane %v802, 1
    %v824 = vsel %vm126, %v823, %v822
    %v825 = vsel %vm128, %v824, 0
    %827 = vmatprep.subr.mxu0 0.0
    %828 = vmatpush1.msra.mxu0 0.0
    %829 = vmatprep.subr.mxu0 0.0
    %830 = vmatpush1.msra.mxu0 0.0
    %831 = vmatprep.subr.mxu0 0.0
    %832 = vmatpush1.msra.mxu0 0.0
    %833 = vmatprep.subr.mxu0 0.0
    %834 = vmatpush1.msra.mxu0 0.0
    %835 = vmatprep.subr.mxu0 0.0
    %836 = vmatpush1.msra.mxu0 0.0
    %837 = vmatprep.subr.mxu0 0.0
    %838 = vmatpush1.msra.mxu0 0.0
    %839 = vmatprep.subr.mxu0 0.0
    %840 = vmatpush1.msra.mxu0 0.0
    %841 = vmatprep.subr.mxu0 0.0
    %842 = vmatpush1.msra.mxu0 0.0
    %843 = vmatprep.subr.mxu0 0.0
    %844 = vmatpush1.msra.mxu0 0.0
    %845 = vmatprep.subr.mxu0 0.0
    %846 = vmatpush1.msra.mxu0 0.0
    %847 = vmatprep.subr.mxu0 0.0
    %848 = vmatpush1.msra.mxu0 0.0
    %849 = vmatprep.subr.mxu0 0.0
    %850 = vmatpush1.msra.mxu0 0.0
    %851 = vmatprep.subr.mxu0 0.0
    %852 = vmatpush1.msra.mxu0 0.0
    %853 = vmatprep.subr.mxu0 0.0
    %854 = vmatpush1.msra.mxu0 0.0
    %855 = vmatprep.subr.mxu0 0.0
    %856 = vmatpush1.msra.mxu0 %v68
    %857 = vmatprep.subr.mxu0 0.0
    %858 = vmatpush1.msra.mxu0 %v67
    %859 = vmatprep.subr.mxu0 0.0
    %860 = vmatpush2.msra.mxu0 0.0
    %861 = vmatprep.subr.mxu0 0.0
    %862 = vmatpush2.msra.mxu0 0.0
    %863 = vmatprep.subr.mxu0 0.0
    %864 = vmatpush2.msra.mxu0 0.0
    %865 = vmatprep.subr.mxu0 0.0
    %866 = vmatpush2.msra.mxu0 0.0
    %867 = vmatprep.subr.mxu0 0.0
    %868 = vmatpush2.msra.mxu0 0.0
    %869 = vmatprep.subr.mxu0 0.0
    %870 = vmatpush2.msra.mxu0 0.0
    %871 = vmatprep.subr.mxu0 0.0
    %872 = vmatpush2.msra.mxu0 0.0
    %873 = vmatprep.subr.mxu0 0.0
    %874 = vmatpush2.msra.mxu0 0.0
    %875 = vmatprep.subr.mxu0 0.0
    %876 = vmatpush2.msra.mxu0 0.0
    %877 = vmatprep.subr.mxu0 0.0
    %878 = vmatpush2.msra.mxu0 0.0
    %879 = vmatprep.subr.mxu0 0.0
    %880 = vmatpush2.msra.mxu0 0.0
    %881 = vmatprep.subr.mxu0 0.0
    %882 = vmatpush2.msra.mxu0 0.0
    %883 = vmatprep.subr.mxu0 0.0
    %884 = vmatpush2.msra.mxu0 0.0
    %885 = vmatprep.subr.mxu0 0.0
    %886 = vmatpush2.msra.mxu0 0.0
    %887 = vmatprep.subr.mxu0 0.0
    %888 = vmatpush2.msra.mxu0 0.0
    %889 = vmatprep.subr.mxu0 0.0
    %890 = vmatpush2.msra.mxu0 0.0
    %891 = vmatprep.mubr.f32.mxu0 0.0
    %892 = vmatmul.mubr.f32.gmra.mxu0 %v825
    %v893 = vpop.f32.mrf.mxu0
    %v894 = vadd.f32 %v98, %v893
    %v895 = vpop.f32.mrf.mxu0
    %896 = vdwg.mxu0
    %897 = vmatprep.subr.mxu0 0.0
    %898 = vmatpush1.msra.mxu0 %v84
    %899 = vmatprep.subr.mxu0 0.0
    %900 = vmatpush1.msra.mxu0 %v83
    %901 = vmatprep.subr.mxu0 0.0
    %902 = vmatpush1.msra.mxu0 %v82
    %903 = vmatprep.subr.mxu0 0.0
    %904 = vmatpush1.msra.mxu0 %v81
    %905 = vmatprep.subr.mxu0 0.0
    %906 = vmatpush1.msra.mxu0 %v80
    %907 = vmatprep.subr.mxu0 0.0
    %908 = vmatpush1.msra.mxu0 %v79
    %909 = vmatprep.subr.mxu0 0.0
    %910 = vmatpush1.msra.mxu0 %v78
    %911 = vmatprep.subr.mxu0 0.0
    %912 = vmatpush1.msra.mxu0 %v77
    %913 = vmatprep.subr.mxu0 0.0
    %914 = vmatpush1.msra.mxu0 %v76
    %915 = vmatprep.subr.mxu0 0.0
    %916 = vmatpush1.msra.mxu0 %v75
    %917 = vmatprep.subr.mxu0 0.0
    %918 = vmatpush1.msra.mxu0 %v74
    %919 = vmatprep.subr.mxu0 0.0
    %920 = vmatpush1.msra.mxu0 %v73
    %921 = vmatprep.subr.mxu0 0.0
    %922 = vmatpush1.msra.mxu0 %v72
    %923 = vmatprep.subr.mxu0 0.0
    %924 = vmatpush1.msra.mxu0 %v71
    %925 = vmatprep.subr.mxu0 0.0
    %926 = vmatpush1.msra.mxu0 %v70
    %927 = vmatprep.subr.mxu0 0.0
    %928 = vmatpush1.msra.mxu0 %v69
    %929 = vmatprep.subr.mxu0 0.0
    %930 = vmatpush2.msra.mxu0 0.0
    %931 = vmatprep.subr.mxu0 0.0
    %932 = vmatpush2.msra.mxu0 0.0
    %933 = vmatprep.subr.mxu0 0.0
    %934 = vmatpush2.msra.mxu0 0.0
    %935 = vmatprep.subr.mxu0 0.0
    %936 = vmatpush2.msra.mxu0 0.0
    %937 = vmatprep.subr.mxu0 0.0
    %938 = vmatpush2.msra.mxu0 0.0
    %939 = vmatprep.subr.mxu0 0.0
    %940 = vmatpush2.msra.mxu0 0.0
    %941 = vmatprep.subr.mxu0 0.0
    %942 = vmatpush2.msra.mxu0 0.0
    %943 = vmatprep.subr.mxu0 0.0
    %944 = vmatpush2.msra.mxu0 0.0
    %945 = vmatprep.subr.mxu0 0.0
    %946 = vmatpush2.msra.mxu0 0.0
    %947 = vmatprep.subr.mxu0 0.0
    %948 = vmatpush2.msra.mxu0 0.0
    %949 = vmatprep.subr.mxu0 0.0
    %950 = vmatpush2.msra.mxu0 0.0
    %951 = vmatprep.subr.mxu0 0.0
    %952 = vmatpush2.msra.mxu0 0.0
    %953 = vmatprep.subr.mxu0 0.0
    %954 = vmatpush2.msra.mxu0 0.0
    %955 = vmatprep.subr.mxu0 0.0
    %956 = vmatpush2.msra.mxu0 0.0
    %957 = vmatprep.subr.mxu0 0.0
    %958 = vmatpush2.msra.mxu0 0.0
    %959 = vmatprep.subr.mxu0 0.0
    %960 = vmatpush2.msra.mxu0 0.0
    %961 = vmatprep.mubr.f32.mxu0 0.0
    %962 = vmatmul.mubr.f32.gmra.mxu0 %v794
    %v963 = vpop.f32.mrf.mxu0
    %v964 = vadd.f32 0.0, %v963
    %v965 = vpop.f32.mrf.mxu0
    %966 = vdwg.mxu0
    %v967 = vadd.f32 %v894, %v964
    %v968 = vtanh.pop %v967
    %v969 = vld [vmem:[#allocation4 + $0x5] sm:$0x1]
    %v970 = vld [vmem:[#allocation4 + $0xd] sm:$0x1]
    %v971 = vld [vmem:[#allocation4 + $0x15] sm:$0x1]
    %v972 = vld [vmem:[#allocation4 + $0x1d] sm:$0x1]
    %v973 = vld [vmem:[#allocation4 + $0x25] sm:$0x1]
    %v974 = vld [vmem:[#allocation4 + $0x2d] sm:$0x1]
    %v975 = vld [vmem:[#allocation4 + $0x35] sm:$0x1]
    %v976 = vld [vmem:[#allocation4 + $0x3d] sm:$0x1]
    %v985 = vrot.slane %v970, 7
    %v986 = vsel %vm108, %v985, %v969
    %v987 = vrot.slane %v971, 6
    %v988 = vsel %vm111, %v987, %v986
    %v989 = vrot.slane %v972, 5
    %v990 = vsel %vm114, %v989, %v988
    %v991 = vrot.slane %v973, 4
    %v992 = vsel %vm117, %v991, %v990
    %v993 = vrot.slane %v974, 3
    %v994 = vsel %vm120, %v993, %v992
    %v995 = vrot.slane %v975, 2
    %v996 = vsel %vm123, %v995, %v994
    %v997 = vrot.slane %v976, 1
    %v998 = vsel %vm126, %v997, %v996
    %v999 = vsel %vm128, %v998, 0
    %1001 = vmatprep.subr.mxu0 0.0
    %1002 = vmatpush1.msra.mxu0 0.0
    %1003 = vmatprep.subr.mxu0 0.0
    %1004 = vmatpush1.msra.mxu0 0.0
    %1005 = vmatprep.subr.mxu0 0.0
    %1006 = vmatpush1.msra.mxu0 0.0
    %1007 = vmatprep.subr.mxu0 0.0
    %1008 = vmatpush1.msra.mxu0 0.0
    %1009 = vmatprep.subr.mxu0 0.0
    %1010 = vmatpush1.msra.mxu0 0.0
    %1011 = vmatprep.subr.mxu0 0.0
    %1012 = vmatpush1.msra.mxu0 0.0
    %1013 = vmatprep.subr.mxu0 0.0
    %1014 = vmatpush1.msra.mxu0 0.0
    %1015 = vmatprep.subr.mxu0 0.0
    %1016 = vmatpush1.msra.mxu0 0.0
    %1017 = vmatprep.subr.mxu0 0.0
    %1018 = vmatpush1.msra.mxu0 0.0
    %1019 = vmatprep.subr.mxu0 0.0
    %1020 = vmatpush1.msra.mxu0 0.0
    %1021 = vmatprep.subr.mxu0 0.0
    %1022 = vmatpush1.msra.mxu0 0.0
    %1023 = vmatprep.subr.mxu0 0.0
    %1024 = vmatpush1.msra.mxu0 0.0
    %1025 = vmatprep.subr.mxu0 0.0
    %1026 = vmatpush1.msra.mxu0 0.0
    %1027 = vmatprep.subr.mxu0 0.0
    %1028 = vmatpush1.msra.mxu0 0.0
    %1029 = vmatprep.subr.mxu0 0.0
    %1030 = vmatpush1.msra.mxu0 %v68
    %1031 = vmatprep.subr.mxu0 0.0
    %1032 = vmatpush1.msra.mxu0 %v67
    %1033 = vmatprep.subr.mxu0 0.0
    %1034 = vmatpush2.msra.mxu0 0.0
    %1035 = vmatprep.subr.mxu0 0.0
    %1036 = vmatpush2.msra.mxu0 0.0
    %1037 = vmatprep.subr.mxu0 0.0
    %1038 = vmatpush2.msra.mxu0 0.0
    %1039 = vmatprep.subr.mxu0 0.0
    %1040 = vmatpush2.msra.mxu0 0.0
    %1041 = vmatprep.subr.mxu0 0.0
    %1042 = vmatpush2.msra.mxu0 0.0
    %1043 = vmatprep.subr.mxu0 0.0
    %1044 = vmatpush2.msra.mxu0 0.0
    %1045 = vmatprep.subr.mxu0 0.0
    %1046 = vmatpush2.msra.mxu0 0.0
    %1047 = vmatprep.subr.mxu0 0.0
    %1048 = vmatpush2.msra.mxu0 0.0
    %1049 = vmatprep.subr.mxu0 0.0
    %1050 = vmatpush2.msra.mxu0 0.0
    %1051 = vmatprep.subr.mxu0 0.0
    %1052 = vmatpush2.msra.mxu0 0.0
    %1053 = vmatprep.subr.mxu0 0.0
    %1054 = vmatpush2.msra.mxu0 0.0
    %1055 = vmatprep.subr.mxu0 0.0
    %1056 = vmatpush2.msra.mxu0 0.0
    %1057 = vmatprep.subr.mxu0 0.0
    %1058 = vmatpush2.msra.mxu0 0.0
    %1059 = vmatprep.subr.mxu0 0.0
    %1060 = vmatpush2.msra.mxu0 0.0
    %1061 = vmatprep.subr.mxu0 0.0
    %1062 = vmatpush2.msra.mxu0 0.0
    %1063 = vmatprep.subr.mxu0 0.0
    %1064 = vmatpush2.msra.mxu0 0.0
    %1065 = vmatprep.mubr.f32.mxu0 0.0
    %1066 = vmatmul.mubr.f32.gmra.mxu0 %v999
    %v1067 = vpop.f32.mrf.mxu0
    %v1068 = vadd.f32 %v98, %v1067
    %v1069 = vpop.f32.mrf.mxu0
    %1070 = vdwg.mxu0
    %1071 = vmatprep.subr.mxu0 0.0
    %1072 = vmatpush1.msra.mxu0 %v84
    %1073 = vmatprep.subr.mxu0 0.0
    %1074 = vmatpush1.msra.mxu0 %v83
    %1075 = vmatprep.subr.mxu0 0.0
    %1076 = vmatpush1.msra.mxu0 %v82
    %1077 = vmatprep.subr.mxu0 0.0
    %1078 = vmatpush1.msra.mxu0 %v81
    %1079 = vmatprep.subr.mxu0 0.0
    %1080 = vmatpush1.msra.mxu0 %v80
    %1081 = vmatprep.subr.mxu0 0.0
    %1082 = vmatpush1.msra.mxu0 %v79
    %1083 = vmatprep.subr.mxu0 0.0
    %1084 = vmatpush1.msra.mxu0 %v78
    %1085 = vmatprep.subr.mxu0 0.0
    %1086 = vmatpush1.msra.mxu0 %v77
    %1087 = vmatprep.subr.mxu0 0.0
    %1088 = vmatpush1.msra.mxu0 %v76
    %1089 = vmatprep.subr.mxu0 0.0
    %1090 = vmatpush1.msra.mxu0 %v75
    %1091 = vmatprep.subr.mxu0 0.0
    %1092 = vmatpush1.msra.mxu0 %v74
    %1093 = vmatprep.subr.mxu0 0.0
    %1094 = vmatpush1.msra.mxu0 %v73
    %1095 = vmatprep.subr.mxu0 0.0
    %1096 = vmatpush1.msra.mxu0 %v72
    %1097 = vmatprep.subr.mxu0 0.0
    %1098 = vmatpush1.msra.mxu0 %v71
    %1099 = vmatprep.subr.mxu0 0.0
    %1100 = vmatpush1.msra.mxu0 %v70
    %1101 = vmatprep.subr.mxu0 0.0
    %1102 = vmatpush1.msra.mxu0 %v69
    %1103 = vmatprep.subr.mxu0 0.0
    %1104 = vmatpush2.msra.mxu0 0.0
    %1105 = vmatprep.subr.mxu0 0.0
    %1106 = vmatpush2.msra.mxu0 0.0
    %1107 = vmatprep.subr.mxu0 0.0
    %1108 = vmatpush2.msra.mxu0 0.0
    %1109 = vmatprep.subr.mxu0 0.0
    %1110 = vmatpush2.msra.mxu0 0.0
    %1111 = vmatprep.subr.mxu0 0.0
    %1112 = vmatpush2.msra.mxu0 0.0
    %1113 = vmatprep.subr.mxu0 0.0
    %1114 = vmatpush2.msra.mxu0 0.0
    %1115 = vmatprep.subr.mxu0 0.0
    %1116 = vmatpush2.msra.mxu0 0.0
    %1117 = vmatprep.subr.mxu0 0.0
    %1118 = vmatpush2.msra.mxu0 0.0
    %1119 = vmatprep.subr.mxu0 0.0
    %1120 = vmatpush2.msra.mxu0 0.0
    %1121 = vmatprep.subr.mxu0 0.0
    %1122 = vmatpush2.msra.mxu0 0.0
    %1123 = vmatprep.subr.mxu0 0.0
    %1124 = vmatpush2.msra.mxu0 0.0
    %1125 = vmatprep.subr.mxu0 0.0
    %1126 = vmatpush2.msra.mxu0 0.0
    %1127 = vmatprep.subr.mxu0 0.0
    %1128 = vmatpush2.msra.mxu0 0.0
    %1129 = vmatprep.subr.mxu0 0.0
    %1130 = vmatpush2.msra.mxu0 0.0
    %1131 = vmatprep.subr.mxu0 0.0
    %1132 = vmatpush2.msra.mxu0 0.0
    %1133 = vmatprep.subr.mxu0 0.0
    %1134 = vmatpush2.msra.mxu0 0.0
    %1135 = vmatprep.mubr.f32.mxu0 0.0
    %1136 = vmatmul.mubr.f32.gmra.mxu0 %v968
    %v1137 = vpop.f32.mrf.mxu0
    %v1138 = vadd.f32 0.0, %v1137
    %v1139 = vpop.f32.mrf.mxu0
    %1140 = vdwg.mxu0
    %v1141 = vadd.f32 %v1068, %v1138
    %v1142 = vtanh.pop %v1141
    %v1143 = vld [vmem:[#allocation4 + $0x6] sm:$0x1]
    %v1144 = vld [vmem:[#allocation4 + $0xe] sm:$0x1]
    %v1145 = vld [vmem:[#allocation4 + $0x16] sm:$0x1]
    %v1146 = vld [vmem:[#allocation4 + $0x1e] sm:$0x1]
    %v1147 = vld [vmem:[#allocation4 + $0x26] sm:$0x1]
    %v1148 = vld [vmem:[#allocation4 + $0x2e] sm:$0x1]
    %v1149 = vld [vmem:[#allocation4 + $0x36] sm:$0x1]
    %v1150 = vld [vmem:[#allocation4 + $0x3e] sm:$0x1]
    %v1159 = vrot.slane %v1144, 7
    %v1160 = vsel %vm108, %v1159, %v1143
    %v1161 = vrot.slane %v1145, 6
    %v1162 = vsel %vm111, %v1161, %v1160
    %v1163 = vrot.slane %v1146, 5
    %v1164 = vsel %vm114, %v1163, %v1162
    %v1165 = vrot.slane %v1147, 4
    %v1166 = vsel %vm117, %v1165, %v1164
    %v1167 = vrot.slane %v1148, 3
    %v1168 = vsel %vm120, %v1167, %v1166
    %v1169 = vrot.slane %v1149, 2
    %v1170 = vsel %vm123, %v1169, %v1168
    %v1171 = vrot.slane %v1150, 1
    %v1172 = vsel %vm126, %v1171, %v1170
    %v1173 = vsel %vm128, %v1172, 0
    %1175 = vmatprep.subr.mxu0 0.0
    %1176 = vmatpush1.msra.mxu0 0.0
    %1177 = vmatprep.subr.mxu0 0.0
    %1178 = vmatpush1.msra.mxu0 0.0
    %1179 = vmatprep.subr.mxu0 0.0
    %1180 = vmatpush1.msra.mxu0 0.0
    %1181 = vmatprep.subr.mxu0 0.0
    %1182 = vmatpush1.msra.mxu0 0.0
    %1183 = vmatprep.subr.mxu0 0.0
    %1184 = vmatpush1.msra.mxu0 0.0
    %1185 = vmatprep.subr.mxu0 0.0
    %1186 = vmatpush1.msra.mxu0 0.0
    %1187 = vmatprep.subr.mxu0 0.0
    %1188 = vmatpush1.msra.mxu0 0.0
    %1189 = vmatprep.subr.mxu0 0.0
    %1190 = vmatpush1.msra.mxu0 0.0
    %1191 = vmatprep.subr.mxu0 0.0
    %1192 = vmatpush1.msra.mxu0 0.0
    %1193 = vmatprep.subr.mxu0 0.0
    %1194 = vmatpush1.msra.mxu0 0.0
    %1195 = vmatprep.subr.mxu0 0.0
    %1196 = vmatpush1.msra.mxu0 0.0
    %1197 = vmatprep.subr.mxu0 0.0
    %1198 = vmatpush1.msra.mxu0 0.0
    %1199 = vmatprep.subr.mxu0 0.0
    %1200 = vmatpush1.msra.mxu0 0.0
    %1201 = vmatprep.subr.mxu0 0.0
    %1202 = vmatpush1.msra.mxu0 0.0
    %1203 = vmatprep.subr.mxu0 0.0
    %1204 = vmatpush1.msra.mxu0 %v68
    %1205 = vmatprep.subr.mxu0 0.0
    %1206 = vmatpush1.msra.mxu0 %v67
    %1207 = vmatprep.subr.mxu0 0.0
    %1208 = vmatpush2.msra.mxu0 0.0
    %1209 = vmatprep.subr.mxu0 0.0
    %1210 = vmatpush2.msra.mxu0 0.0
    %1211 = vmatprep.subr.mxu0 0.0
    %1212 = vmatpush2.msra.mxu0 0.0
    %1213 = vmatprep.subr.mxu0 0.0
    %1214 = vmatpush2.msra.mxu0 0.0
    %1215 = vmatprep.subr.mxu0 0.0
    %1216 = vmatpush2.msra.mxu0 0.0
    %1217 = vmatprep.subr.mxu0 0.0
    %1218 = vmatpush2.msra.mxu0 0.0
    %1219 = vmatprep.subr.mxu0 0.0
    %1220 = vmatpush2.msra.mxu0 0.0
    %1221 = vmatprep.subr.mxu0 0.0
    %1222 = vmatpush2.msra.mxu0 0.0
    %1223 = vmatprep.subr.mxu0 0.0
    %1224 = vmatpush2.msra.mxu0 0.0
    %1225 = vmatprep.subr.mxu0 0.0
    %1226 = vmatpush2.msra.mxu0 0.0
    %1227 = vmatprep.subr.mxu0 0.0
    %1228 = vmatpush2.msra.mxu0 0.0
    %1229 = vmatprep.subr.mxu0 0.0
    %1230 = vmatpush2.msra.mxu0 0.0
    %1231 = vmatprep.subr.mxu0 0.0
    %1232 = vmatpush2.msra.mxu0 0.0
    %1233 = vmatprep.subr.mxu0 0.0
    %1234 = vmatpush2.msra.mxu0 0.0
    %1235 = vmatprep.subr.mxu0 0.0
    %1236 = vmatpush2.msra.mxu0 0.0
    %1237 = vmatprep.subr.mxu0 0.0
    %1238 = vmatpush2.msra.mxu0 0.0
    %1239 = vmatprep.mubr.f32.mxu0 0.0
    %1240 = vmatmul.mubr.f32.gmra.mxu0 %v1173
    %v1241 = vpop.f32.mrf.mxu0
    %v1242 = vadd.f32 %v98, %v1241
    %v1243 = vpop.f32.mrf.mxu0
    %1244 = vdwg.mxu0
    %1245 = vmatprep.subr.mxu0 0.0
    %1246 = vmatpush1.msra.mxu0 %v84
    %1247 = vmatprep.subr.mxu0 0.0
    %1248 = vmatpush1.msra.mxu0 %v83
    %1249 = vmatprep.subr.mxu0 0.0
    %1250 = vmatpush1.msra.mxu0 %v82
    %1251 = vmatprep.subr.mxu0 0.0
    %1252 = vmatpush1.msra.mxu0 %v81
    %1253 = vmatprep.subr.mxu0 0.0
    %1254 = vmatpush1.msra.mxu0 %v80
    %1255 = vmatprep.subr.mxu0 0.0
    %1256 = vmatpush1.msra.mxu0 %v79
    %1257 = vmatprep.subr.mxu0 0.0
    %1258 = vmatpush1.msra.mxu0 %v78
    %1259 = vmatprep.subr.mxu0 0.0
    %1260 = vmatpush1.msra.mxu0 %v77
    %1261 = vmatprep.subr.mxu0 0.0
    %1262 = vmatpush1.msra.mxu0 %v76
    %1263 = vmatprep.subr.mxu0 0.0
    %1264 = vmatpush1.msra.mxu0 %v75
    %1265 = vmatprep.subr.mxu0 0.0
    %1266 = vmatpush1.msra.mxu0 %v74
    %1267 = vmatprep.subr.mxu0 0.0
    %1268 = vmatpush1.msra.mxu0 %v73
    %1269 = vmatprep.subr.mxu0 0.0
    %1270 = vmatpush1.msra.mxu0 %v72
    %1271 = vmatprep.subr.mxu0 0.0
    %1272 = vmatpush1.msra.mxu0 %v71
    %1273 = vmatprep.subr.mxu0 0.0
    %1274 = vmatpush1.msra.mxu0 %v70
    %1275 = vmatprep.subr.mxu0 0.0
    %1276 = vmatpush1.msra.mxu0 %v69
    %1277 = vmatprep.subr.mxu0 0.0
    %1278 = vmatpush2.msra.mxu0 0.0
    %1279 = vmatprep.subr.mxu0 0.0
    %1280 = vmatpush2.msra.mxu0 0.0
    %1281 = vmatprep.subr.mxu0 0.0
    %1282 = vmatpush2.msra.mxu0 0.0
    %1283 = vmatprep.subr.mxu0 0.0
    %1284 = vmatpush2.msra.mxu0 0.0
    %1285 = vmatprep.subr.mxu0 0.0
    %1286 = vmatpush2.msra.mxu0 0.0
    %1287 = vmatprep.subr.mxu0 0.0
    %1288 = vmatpush2.msra.mxu0 0.0
    %1289 = vmatprep.subr.mxu0 0.0
    %1290 = vmatpush2.msra.mxu0 0.0
    %1291 = vmatprep.subr.mxu0 0.0
    %1292 = vmatpush2.msra.mxu0 0.0
    %1293 = vmatprep.subr.mxu0 0.0
    %1294 = vmatpush2.msra.mxu0 0.0
    %1295 = vmatprep.subr.mxu0 0.0
    %1296 = vmatpush2.msra.mxu0 0.0
    %1297 = vmatprep.subr.mxu0 0.0
    %1298 = vmatpush2.msra.mxu0 0.0
    %1299 = vmatprep.subr.mxu0 0.0
    %1300 = vmatpush2.msra.mxu0 0.0
    %1301 = vmatprep.subr.mxu0 0.0
    %1302 = vmatpush2.msra.mxu0 0.0
    %1303 = vmatprep.subr.mxu0 0.0
    %1304 = vmatpush2.msra.mxu0 0.0
    %1305 = vmatprep.subr.mxu0 0.0
    %1306 = vmatpush2.msra.mxu0 0.0
    %1307 = vmatprep.subr.mxu0 0.0
    %1308 = vmatpush2.msra.mxu0 0.0
    %1309 = vmatprep.mubr.f32.mxu0 0.0
    %1310 = vmatmul.mubr.f32.gmra.mxu0 %v1142
    %v1311 = vpop.f32.mrf.mxu0
    %v1312 = vadd.f32 0.0, %v1311
    %v1313 = vpop.f32.mrf.mxu0
    %1314 = vdwg.mxu0
    %v1315 = vadd.f32 %v1242, %v1312
    %v1316 = vtanh.pop %v1315
    %v1317 = vld [vmem:[#allocation4 + $0x7] sm:$0x1]
    %v1318 = vld [vmem:[#allocation4 + $0xf] sm:$0x1]
    %v1319 = vld [vmem:[#allocation4 + $0x17] sm:$0x1]
    %v1320 = vld [vmem:[#allocation4 + $0x1f] sm:$0x1]
    %v1321 = vld [vmem:[#allocation4 + $0x27] sm:$0x1]
    %v1322 = vld [vmem:[#allocation4 + $0x2f] sm:$0x1]
    %v1323 = vld [vmem:[#allocation4 + $0x37] sm:$0x1]
    %v1324 = vld [vmem:[#allocation4 + $0x3f] sm:$0x1]
    %v1333 = vrot.slane %v1318, 7
    %v1334 = vsel %vm108, %v1333, %v1317
    %v1335 = vrot.slane %v1319, 6
    %v1336 = vsel %vm111, %v1335, %v1334
    %v1337 = vrot.slane %v1320, 5
    %v1338 = vsel %vm114, %v1337, %v1336
    %v1339 = vrot.slane %v1321, 4
    %v1340 = vsel %vm117, %v1339, %v1338
    %v1341 = vrot.slane %v1322, 3
    %v1342 = vsel %vm120, %v1341, %v1340
    %v1343 = vrot.slane %v1323, 2
    %v1344 = vsel %vm123, %v1343, %v1342
    %v1345 = vrot.slane %v1324, 1
    %v1346 = vsel %vm126, %v1345, %v1344
    %v1347 = vsel %vm128, %v1346, 0
    %1349 = vmatprep.subr.mxu0 0.0
    %1350 = vmatpush1.msra.mxu0 0.0
    %1351 = vmatprep.subr.mxu0 0.0
    %1352 = vmatpush1.msra.mxu0 0.0
    %1353 = vmatprep.subr.mxu0 0.0
    %1354 = vmatpush1.msra.mxu0 0.0
    %1355 = vmatprep.subr.mxu0 0.0
    %1356 = vmatpush1.msra.mxu0 0.0
    %1357 = vmatprep.subr.mxu0 0.0
    %1358 = vmatpush1.msra.mxu0 0.0
    %1359 = vmatprep.subr.mxu0 0.0
    %1360 = vmatpush1.msra.mxu0 0.0
    %1361 = vmatprep.subr.mxu0 0.0
    %1362 = vmatpush1.msra.mxu0 0.0
    %1363 = vmatprep.subr.mxu0 0.0
    %1364 = vmatpush1.msra.mxu0 0.0
    %1365 = vmatprep.subr.mxu0 0.0
    %1366 = vmatpush1.msra.mxu0 0.0
    %1367 = vmatprep.subr.mxu0 0.0
    %1368 = vmatpush1.msra.mxu0 0.0
    %1369 = vmatprep.subr.mxu0 0.0
    %1370 = vmatpush1.msra.mxu0 0.0
    %1371 = vmatprep.subr.mxu0 0.0
    %1372 = vmatpush1.msra.mxu0 0.0
    %1373 = vmatprep.subr.mxu0 0.0
    %1374 = vmatpush1.msra.mxu0 0.0
    %1375 = vmatprep.subr.mxu0 0.0
    %1376 = vmatpush1.msra.mxu0 0.0
    %1377 = vmatprep.subr.mxu0 0.0
    %1378 = vmatpush1.msra.mxu0 %v68
    %1379 = vmatprep.subr.mxu0 0.0
    %1380 = vmatpush1.msra.mxu0 %v67
    %1381 = vmatprep.subr.mxu0 0.0
    %1382 = vmatpush2.msra.mxu0 0.0
    %1383 = vmatprep.subr.mxu0 0.0
    %1384 = vmatpush2.msra.mxu0 0.0
    %1385 = vmatprep.subr.mxu0 0.0
    %1386 = vmatpush2.msra.mxu0 0.0
    %1387 = vmatprep.subr.mxu0 0.0
    %1388 = vmatpush2.msra.mxu0 0.0
    %1389 = vmatprep.subr.mxu0 0.0
    %1390 = vmatpush2.msra.mxu0 0.0
    %1391 = vmatprep.subr.mxu0 0.0
    %1392 = vmatpush2.msra.mxu0 0.0
    %1393 = vmatprep.subr.mxu0 0.0
    %1394 = vmatpush2.msra.mxu0 0.0
    %1395 = vmatprep.subr.mxu0 0.0
    %1396 = vmatpush2.msra.mxu0 0.0
    %1397 = vmatprep.subr.mxu0 0.0
    %1398 = vmatpush2.msra.mxu0 0.0
    %1399 = vmatprep.subr.mxu0 0.0
    %1400 = vmatpush2.msra.mxu0 0.0
    %1401 = vmatprep.subr.mxu0 0.0
    %1402 = vmatpush2.msra.mxu0 0.0
    %1403 = vmatprep.subr.mxu0 0.0
    %1404 = vmatpush2.msra.mxu0 0.0
    %1405 = vmatprep.subr.mxu0 0.0
    %1406 = vmatpush2.msra.mxu0 0.0
    %1407 = vmatprep.subr.mxu0 0.0
    %1408 = vmatpush2.msra.mxu0 0.0
    %1409 = vmatprep.subr.mxu0 0.0
    %1410 = vmatpush2.msra.mxu0 0.0
    %1411 = vmatprep.subr.mxu0 0.0
    %1412 = vmatpush2.msra.mxu0 0.0
    %1413 = vmatprep.mubr.f32.mxu0 0.0
    %1414 = vmatmul.mubr.f32.gmra.mxu0 %v1347
    %v1415 = vpop.f32.mrf.mxu0
    %v1416 = vadd.f32 %v98, %v1415
    %v1417 = vpop.f32.mrf.mxu0
    %1418 = vdwg.mxu0
    %1419 = vmatprep.subr.mxu0 0.0
    %1420 = vmatpush1.msra.mxu0 %v84
    %1421 = vmatprep.subr.mxu0 0.0
    %1422 = vmatpush1.msra.mxu0 %v83
    %1423 = vmatprep.subr.mxu0 0.0
    %1424 = vmatpush1.msra.mxu0 %v82
    %1425 = vmatprep.subr.mxu0 0.0
    %1426 = vmatpush1.msra.mxu0 %v81
    %1427 = vmatprep.subr.mxu0 0.0
    %1428 = vmatpush1.msra.mxu0 %v80
    %1429 = vmatprep.subr.mxu0 0.0
    %1430 = vmatpush1.msra.mxu0 %v79
    %1431 = vmatprep.subr.mxu0 0.0
    %1432 = vmatpush1.msra.mxu0 %v78
    %1433 = vmatprep.subr.mxu0 0.0
    %1434 = vmatpush1.msra.mxu0 %v77
    %1435 = vmatprep.subr.mxu0 0.0
    %1436 = vmatpush1.msra.mxu0 %v76
    %1437 = vmatprep.subr.mxu0 0.0
    %1438 = vmatpush1.msra.mxu0 %v75
    %1439 = vmatprep.subr.mxu0 0.0
    %1440 = vmatpush1.msra.mxu0 %v74
    %1441 = vmatprep.subr.mxu0 0.0
    %1442 = vmatpush1.msra.mxu0 %v73
    %1443 = vmatprep.subr.mxu0 0.0
    %1444 = vmatpush1.msra.mxu0 %v72
    %1445 = vmatprep.subr.mxu0 0.0
    %1446 = vmatpush1.msra.mxu0 %v71
    %1447 = vmatprep.subr.mxu0 0.0
    %1448 = vmatpush1.msra.mxu0 %v70
    %1449 = vmatprep.subr.mxu0 0.0
    %1450 = vmatpush1.msra.mxu0 %v69
    %1451 = vmatprep.subr.mxu0 0.0
    %1452 = vmatpush2.msra.mxu0 0.0
    %1453 = vmatprep.subr.mxu0 0.0
    %1454 = vmatpush2.msra.mxu0 0.0
    %1455 = vmatprep.subr.mxu0 0.0
    %1456 = vmatpush2.msra.mxu0 0.0
    %1457 = vmatprep.subr.mxu0 0.0
    %1458 = vmatpush2.msra.mxu0 0.0
    %1459 = vmatprep.subr.mxu0 0.0
    %1460 = vmatpush2.msra.mxu0 0.0
    %1461 = vmatprep.subr.mxu0 0.0
    %1462 = vmatpush2.msra.mxu0 0.0
    %1463 = vmatprep.subr.mxu0 0.0
    %1464 = vmatpush2.msra.mxu0 0.0
    %1465 = vmatprep.subr.mxu0 0.0
    %1466 = vmatpush2.msra.mxu0 0.0
    %1467 = vmatprep.subr.mxu0 0.0
    %1468 = vmatpush2.msra.mxu0 0.0
    %1469 = vmatprep.subr.mxu0 0.0
    %1470 = vmatpush2.msra.mxu0 0.0
    %1471 = vmatprep.subr.mxu0 0.0
    %1472 = vmatpush2.msra.mxu0 0.0
    %1473 = vmatprep.subr.mxu0 0.0
    %1474 = vmatpush2.msra.mxu0 0.0
    %1475 = vmatprep.subr.mxu0 0.0
    %1476 = vmatpush2.msra.mxu0 0.0
    %1477 = vmatprep.subr.mxu0 0.0
    %1478 = vmatpush2.msra.mxu0 0.0
    %1479 = vmatprep.subr.mxu0 0.0
    %1480 = vmatpush2.msra.mxu0 0.0
    %1481 = vmatprep.subr.mxu0 0.0
    %1482 = vmatpush2.msra.mxu0 0.0
    %1483 = vmatprep.mubr.f32.mxu0 0.0
    %1484 = vmatmul.mubr.f32.gmra.mxu0 %v1316
    %v1485 = vpop.f32.mrf.mxu0
    %v1486 = vadd.f32 0.0, %v1485
    %v1487 = vpop.f32.mrf.mxu0
    %1488 = vdwg.mxu0
    %v1489 = vadd.f32 %v1416, %v1486
    %v1490 = vtanh.pop %v1489
    %1491 = vst [vmem:[#allocation2] sm:$0xff] %v1490
    // Predicated region
    $region38: #{tpu_custom_call.1} parent=1 // pred_check
      %p1492 = pneg %p62
    $region39: #{tpu_custom_call.1} parent=1 // pred_check_branch
      %1494 = sbr.rel (%p1492) target = $region41
    $region40: #{tpu_custom_call.1} parent=1 // pred_region
      %v1495 = vld [vmem:[%s3 + $0x1] sm:$0x1]
      %v1496 = vlaneseq
      %v1497 = vshrl.u32 %v1496, 7
      %v1498 = vsub.s32 0, %v1497
      %v1499 = vrot.slane %v1495, %v1498
      %v1500 = vmul.f32 %v1490, %v1499
      %1501 = vadd.xlane.f32.xlu0 %v1500
      %v1502 = vpop.xlane.xlu0 %1501
      %s1503 = sld [smem:[#allocation3]]
      %v1504 = vstv %s1503
      %v1505 = vadd.f32 %v1502, %v1504
      %vm1506 = vcmask 7168
      %1507 = vst.msk [vmem:[%s5] sm:$0xff] %vm1506, %v1505
    $region41: #{tpu_custom_call.1} parent=1 // pred_fallthru
      _
    // Predicated region
    $region42: #{tpu_custom_call.1} parent=1 // pred_check
      _
    $region43: #{tpu_custom_call.1} parent=1 // pred_check_branch
      %1509 = sbr.rel (0) target = $region45
    $region44: #{tpu_custom_call.1} parent=1 // pred_region
      _
    $region45: #{tpu_custom_call.1} parent=1 // pred_fallthru
      _
    // Predicated region
    $region46: #{tpu_custom_call.1} parent=1 // pred_check
      _
    $region47: #{tpu_custom_call.1} parent=1 // pred_check_branch
      %1511 = sbr.rel (0) target = $region49
    $region48: #{tpu_custom_call.1} parent=1 // pred_region
      _
    $region49: #{tpu_custom_call.1} parent=1 // pred_fallthru
      _
    %1512 = vsyncpa [#allocation5], 1
    %1513 = vsyncpa [#allocation7], 1

</llo_original>
